<compile_context>
chip_gen: v5e
topology: v5e:2x2
jax: 0.10.0
libtpu: 0.0.40
codegen_flags: <defaults>
</compile_context>

<pallas_src>
import functools
import numpy as np
import jax
import jax.numpy as jnp
from jax.experimental import pallas as pl
from jax.experimental.pallas import tpu as pltpu


_VMEM = pl.BlockSpec(memory_space=pltpu.MemorySpace.VMEM)
_SMEM = pl.BlockSpec(memory_space=pltpu.MemorySpace.SMEM)


# --------------------------- fused multi-layer kernel ---------------------------

def _dgm_fused_kernel(temps_ref, edges_ref, x_ref, noise_ref, *refs,
                      nn, k, num_layers, warm_up):
    f32 = jnp.float32
    w_refs = refs[:4 * num_layers]
    xcat_ref, lprobs_ref, idx_ref = refs[4 * num_layers:]

    row_ids = jax.lax.broadcasted_iota(jnp.int32, (nn, nn), 0)
    col_ids = jax.lax.broadcasted_iota(jnp.int32, (nn, nn), 1)
    col_f = col_ids.astype(f32)
    eye = row_ids == col_ids

    # --- initial dense adjacency from the edge list, built in-kernel -----------
    # A0[i, j] = 1 for edge j -> i (edge_index = [source; target]), via a
    # one-hot/one-hot matmul on the MXU; self-loops forced to 1 (GCNConv
    # add_self_loops).  Duplicate edges are deduplicated.
    # TODO(synk): PyG counts duplicate edges in the degree; dense dedup can
    # differ by 1 in the normalization for multigraph inputs.
    ei = edges_ref[...]                                   # [2, E] int32
    E = ei.shape[1]
    iota_ne = jax.lax.broadcasted_iota(jnp.int32, (nn, E), 0)
    oh_src = (iota_ne == ei[0:1, :]).astype(f32)          # [nn, E]
    oh_dst = (iota_ne == ei[1:2, :]).astype(f32)          # [nn, E]
    a0 = jax.lax.dot_general(oh_dst, oh_src, (((1,), (1,)), ((), ())),
                             preferred_element_type=f32)  # [nn, nn]
    a0 = jnp.where(eye, 1.0, jnp.minimum(a0, 1.0))

    x = x_ref[...]                                        # [nn, 3*d_in]
    sel_cols = None                                       # prev layer's top-k cols
    for li in range(num_layers):
        wg = w_refs[4 * li + 0][...]
        bg = w_refs[4 * li + 1][...]
        wf = w_refs[4 * li + 2][...]
        bf = w_refs[4 * li + 3][...]

        # --- adjacency for this layer --------------------------------------
        if li == 0 or warm_up:
            a = a0
        else:
            m = eye                                       # boolean build, cast once
            for kk in range(k):
                m = jnp.logical_or(m, col_ids == sel_cols[kk])
            a = m.astype(f32)

        # --- GCN symmetric normalization without materializing A_norm:
        #     D^-1/2 A D^-1/2 @ X  ==  dinv * (A @ (dinv * X))
        deg = jnp.sum(a, axis=-1, keepdims=True)
        dinv = jax.lax.rsqrt(jnp.maximum(deg, 1e-12))

        # --- three stream GCNs fused via block-diagonal weights, then relu --
        xw = jnp.dot(x, wg, preferred_element_type=f32)
        h = dinv * jnp.dot(a, dinv * xw, preferred_element_type=f32) + bg
        x = jnp.maximum(h, 0.0)                           # [nn, 3H] = cat(x1,x2,x3)

        # --- DGM_d embedding GCN (no relu), same edges ----------------------
        ew = jnp.dot(x, wf, preferred_element_type=f32)
        emb = dinv * jnp.dot(a, dinv * ew, preferred_element_type=f32) + bf

        # --- pairwise squared euclidean distances (cdist^2) -----------------
        sq = jnp.sum(emb * emb, axis=-1, keepdims=True)
        gram = jax.lax.dot_general(emb, emb, (((1,), (1,)), ((), ())),
                                   preferred_element_type=f32)
        dist = jnp.maximum(sq + jnp.transpose(sq) - 2.0 * gram, 0.0)

        # --- temperature scalar + Gumbel perturbation -----------------------
        t = temps_ref[li]
        scale = jnp.exp(jnp.clip(t, -5.0, 5.0))           # scalar exp(clamp(T,-5,5))
        u = noise_ref[li]                                  # [nn, nn] uniform [0,1)
        gumb = jnp.log(-jnp.log(u + 1e-8))                 # matches torch.rand + 1e-8
        v = gumb - dist * scale                            # == -(lq)

        # --- greedy top-k (values desc; first index on ties), direct stores --
        sel_cols = []
        for kk in range(k):
            mx = jnp.max(v, axis=-1, keepdims=True)        # [nn, 1]
            cand = jnp.where(v == mx, col_f, f32(nn))
            sel = jnp.min(cand, axis=-1, keepdims=True).astype(jnp.int32)
            lprobs_ref[:, li * k + kk: li * k + kk + 1] = mx
            if li == num_layers - 1:
                idx_ref[:, kk: kk + 1] = sel
            sel_cols.append(sel)
            v = jnp.where(col_ids == sel, -1e30, v)

    xcat_ref[...] = x


def dgm_layers_call(temps, edge_index, x_cat, noise, layer_weights, *, k, warm_up):
    nn = x_cat.shape[0]
    num_layers = len(layer_weights) // 4
    h_last = layer_weights[4 * (num_layers - 1)].shape[1]
    kernel = functools.partial(_dgm_fused_kernel, nn=nn, k=k,
                               num_layers=num_layers, warm_up=warm_up)
    return pl.pallas_call(
        kernel,
        out_shape=(jax.ShapeDtypeStruct((nn, h_last), jnp.float32),       # cat(x1,x2,x3)
                   jax.ShapeDtypeStruct((nn, num_layers * k), jnp.float32),  # logprobs
                   jax.ShapeDtypeStruct((nn, k), jnp.int32)),              # final top-k idx
        in_specs=[_SMEM, _VMEM, _VMEM, _VMEM] + [_VMEM] * (4 * num_layers),
        out_specs=(_VMEM, _VMEM, _VMEM),
    )(temps, edge_index, x_cat, noise, *layer_weights)


# -------------------------------- glue / model --------------------------------

def _block_diag3(w1, w2, w3):
    z = lambda r, c: jnp.zeros((r, c), w1.dtype)
    r1, c1 = w1.shape
    r2, c2 = w2.shape
    r3, c3 = w3.shape
    return jnp.concatenate([
        jnp.concatenate([w1, z(r1, c2), z(r1, c3)], axis=1),
        jnp.concatenate([z(r2, c1), w2, z(r2, c3)], axis=1),
        jnp.concatenate([z(r3, c1), z(r3, c2), w3], axis=1),
    ], axis=0)


def pack_params(params):
    """Hoist block-diagonal weight packing / bias concat out of the per-forward
    path (computed once, reused every forward)."""
    packed = []
    temps = []
    for lp in params:
        w_blk = _block_diag3(lp["g1_w"], lp["g2_w"], lp["g3_w"])
        b_blk = jnp.concatenate([lp["g1_b"], lp["g2_b"], lp["g3_b"]]).reshape(1, -1)
        packed += [w_blk, b_blk, lp["f_w"], lp["f_b"].reshape(1, -1)]
        temps.append(lp["temperature"].reshape(1))
    return tuple(packed), jnp.concatenate(temps)


def dgm_forward(packed_weights, temps, x1, x2, x3, init_edges, key,
                *, k, warm_up=False):
    """Eval-mode forward of DGM_Model (torch.dropout(train=False) is identity,
    .detach() is a forward no-op).  Requires batch == 1 (training_step assert)."""
    b, n, d = x1.shape
    assert b == 1
    nn = b * n
    num_layers = len(packed_weights) // 4

    x_cat = jnp.concatenate([x1.reshape(nn, d), x2.reshape(nn, d),
                             x3.reshape(nn, d)], axis=-1)          # [nn, 3*d]

    # Gumbel uniforms drawn host-side (jax.random) and passed in; the whole
    # multi-layer graph pipeline then runs as a single fused pallas_call.
    # TODO(synk): in-kernel pltpu.prng_seed/prng_random_bits would drop this
    # HBM input but has no interpret/CPU lowering.
    noise = jax.random.uniform(key, (num_layers, nn, nn), jnp.float32)
    edge_index = init_edges.astype(jnp.int32)

    xcat_o, lprobs_flat, idx = dgm_layers_call(
        temps, edge_index, x_cat, noise, packed_weights, k=k, warm_up=warm_up)

    h = xcat_o.shape[-1] // 3
    x1o = xcat_o[:, :h].reshape(b, n, h)
    x2o = xcat_o[:, h:2 * h].reshape(b, n, h)
    x3o = xcat_o[:, 2 * h:].reshape(b, n, h)
    lprobs = (lprobs_flat.reshape(nn, num_layers, k)
              .transpose(0, 2, 1).reshape(b, n, k, num_layers))

    if warm_up:
        edges = init_edges
    else:                                                           # [source; target]
        rows = jnp.broadcast_to(jnp.arange(n, dtype=jnp.int32)[:, None], (n, k))
        edges = jnp.stack([idx.reshape(-1), rows.reshape(-1)], axis=0)

    return x1o, x2o, x3o, edges, lprobs


def init_params(key, conv_layers, dgm_layers):
    params = []
    for (cin, cout), (fin, fout) in zip(conv_layers, dgm_layers):
        layer = {}
        for name, (i, o) in [("g1", (cin, cout)), ("g2", (cin, cout)),
                             ("g3", (cin, cout)), ("f", (fin, fout))]:
            key, kw = jax.random.split(key)
            lim = float(np.sqrt(6.0 / (i + o)))                     # glorot-uniform
            layer[name + "_w"] = jax.random.uniform(kw, (i, o), jnp.float32, -lim, lim)
            layer[name + "_b"] = jnp.zeros((o,), jnp.float32)
        layer["temperature"] = jnp.full((1,), 4.0, jnp.float32)     # DGM_d init
        params.append(layer)
    return params


if __name__ == "__main__":
    # hparams: conv_layers=[[16,16],[16,16]], dgm_layers=[[48,8],[48,8]],
    #          k=4, distance='euclidean', ffun='gcn', gfun='gcn'
    B, N, D_IN, H, DE, K = 1, 32, 16, 16, 8, 4
    conv_layers = [[D_IN, H], [H, H]]
    dgm_layers = [[3 * H, DE], [3 * H, DE]]

    key = jax.random.PRNGKey(0)
    kp, k1, k2, k3, kfwd = jax.random.split(key, 5)
    params = init_params(kp, conv_layers, dgm_layers)
    packed_w, temps = pack_params(params)                           # hoisted, once

    x1 = jax.random.normal(k1, (B, N, D_IN), jnp.float32)
    x2 = jax.random.normal(k2, (B, N, D_IN), jnp.float32)
    x3 = jax.random.normal(k3, (B, N, D_IN), jnp.float32)

    # deterministic ring graph as init_edges: [2, E] = [source; target]
    ring = np.arange(N)
    src = np.concatenate([(ring - 1) % N, (ring + 1) % N]).astype(np.int32)
    dst = np.concatenate([ring, ring]).astype(np.int32)
    init_edges = jnp.asarray(np.stack([src, dst], axis=0))

    fwd = jax.jit(functools.partial(dgm_forward, k=K, warm_up=False))
    out = fwd(packed_w, temps, x1, x2, x3, init_edges, kfwd)
    x1o, x2o, x3o, edges_o, lprobs = jax.tree_util.tree_map(
        jax.block_until_ready, out)

    assert x1o.shape == (B, N, H) and x2o.shape == (B, N, H) and x3o.shape == (B, N, H)
    assert edges_o.shape == (2, B * N * K)
    assert lprobs.shape == (B, N, K, len(conv_layers))
    assert bool(jnp.all(jnp.isfinite(x1o))) and bool(jnp.all(jnp.isfinite(lprobs)))
    assert bool(jnp.all((edges_o >= 0) & (edges_o < B * N)))

    # TODO(synk): training-mode dropout(0.3) and the training_step graph-loss /
    # optimizer bookkeeping are not reproduced (forward is eval-mode, as in
    # test_step); batch is restricted to 1, matching the reference assert.
    print("KERNEL_OK")
</pallas_src>

<mosaic_0001>
module attributes {stable_mosaic.version = 11 : i64} {
  func.func @_dgm_fused_kernel(%arg0: memref<2xf32, #tpu.memory_space<smem>>, %arg1: memref<2x64xi32, #tpu.memory_space<vmem>>, %arg2: memref<32x48xf32, #tpu.memory_space<vmem>>, %arg3: memref<2x32x32xf32, #tpu.memory_space<vmem>>, %arg4: memref<48x48xf32, #tpu.memory_space<vmem>>, %arg5: memref<1x48xf32, #tpu.memory_space<vmem>>, %arg6: memref<48x8xf32, #tpu.memory_space<vmem>>, %arg7: memref<1x8xf32, #tpu.memory_space<vmem>>, %arg8: memref<48x48xf32, #tpu.memory_space<vmem>>, %arg9: memref<1x48xf32, #tpu.memory_space<vmem>>, %arg10: memref<48x8xf32, #tpu.memory_space<vmem>>, %arg11: memref<1x8xf32, #tpu.memory_space<vmem>>, %arg12: memref<32x48xf32, #tpu.memory_space<vmem>>, %arg13: memref<32x8xf32, #tpu.memory_space<vmem>>, %arg14: memref<32x4xi32, #tpu.memory_space<vmem>>) attributes {dimension_semantics = [], scalar_prefetch = 0 : i64, scratch_operands = 0 : i64, tpu.core_type = #tpu.core_type<tc>} {
    %0 = tpu.iota {dimensions = array<i32: 0>} : vector<32x32xi32>
    %1 = tpu.iota {dimensions = array<i32: 1>} : vector<32x32xi32>
    %2 = arith.sitofp %1 : vector<32x32xi32> to vector<32x32xf32>
    %3 = arith.cmpi eq, %0, %1 : vector<32x32xi32>
    %c0 = arith.constant 0 : index
    %c0_0 = arith.constant 0 : index
    %4 = vector.load %arg1[%c0, %c0_0] : memref<2x64xi32, #tpu.memory_space<vmem>>, vector<2x64xi32>
    %5 = tpu.iota {dimensions = array<i32: 0>} : vector<32x64xi32>
    %6 = vector.extract_strided_slice %4 {offsets = [0, 0], sizes = [1, 64], strides = [1, 1]} : vector<2x64xi32> to vector<1x64xi32>
    %7 = vector.broadcast %6 : vector<1x64xi32> to vector<32x64xi32>
    %8 = arith.cmpi eq, %5, %7 : vector<32x64xi32>
    %9 = arith.extui %8 : vector<32x64xi1> to vector<32x64xi32>
    %10 = arith.sitofp %9 : vector<32x64xi32> to vector<32x64xf32>
    %11 = vector.extract_strided_slice %4 {offsets = [1, 0], sizes = [1, 64], strides = [1, 1]} : vector<2x64xi32> to vector<1x64xi32>
    %12 = vector.broadcast %11 : vector<1x64xi32> to vector<32x64xi32>
    %13 = arith.cmpi eq, %5, %12 : vector<32x64xi32>
    %14 = arith.extui %13 : vector<32x64xi1> to vector<32x64xi32>
    %15 = arith.sitofp %14 : vector<32x64xi32> to vector<32x64xf32>
    %cst = arith.constant dense<0.000000e+00> : vector<32x32xf32>
    %16 = tpu.matmul %15, %10, %cst {dimension_numbers = #tpu.dot_dimension_numbers<[1], [1], [0], [0], [0, 0, 1, 0], [], []>} : vector<32x64xf32>, vector<32x64xf32>, vector<32x32xf32> -> vector<32x32xf32>
    %cst_1 = arith.constant 1.000000e+00 : f32
    %17 = vector.broadcast %cst_1 : f32 to vector<32x32xf32>
    %18 = arith.minimumf %16, %17 : vector<32x32xf32>
    %cst_2 = arith.constant 1.000000e+00 : f32
    %19 = vector.broadcast %cst_2 : f32 to vector<32x32xf32>
    %20 = arith.select %3, %19, %18 : vector<32x32xi1>, vector<32x32xf32>
    %c0_3 = arith.constant 0 : index
    %c0_4 = arith.constant 0 : index
    %21 = vector.load %arg2[%c0_3, %c0_4] : memref<32x48xf32, #tpu.memory_space<vmem>>, vector<32x48xf32>
    %c0_5 = arith.constant 0 : index
    %c0_6 = arith.constant 0 : index
    %22 = vector.load %arg4[%c0_5, %c0_6] : memref<48x48xf32, #tpu.memory_space<vmem>>, vector<48x48xf32>
    %c0_7 = arith.constant 0 : index
    %c0_8 = arith.constant 0 : index
    %23 = vector.load %arg5[%c0_7, %c0_8] : memref<1x48xf32, #tpu.memory_space<vmem>>, vector<1x48xf32>
    %c0_9 = arith.constant 0 : index
    %c0_10 = arith.constant 0 : index
    %24 = vector.load %arg6[%c0_9, %c0_10] : memref<48x8xf32, #tpu.memory_space<vmem>>, vector<48x8xf32>
    %c0_11 = arith.constant 0 : index
    %c0_12 = arith.constant 0 : index
    %25 = vector.load %arg7[%c0_11, %c0_12] : memref<1x8xf32, #tpu.memory_space<vmem>>, vector<1x8xf32>
    %cst_13 = arith.constant dense<0.000000e+00> : vector<32xf32>
    %26 = vector.multi_reduction <add>, %20, %cst_13 [1] : vector<32x32xf32> to vector<32xf32>
    %27 = vector.shape_cast %26 : vector<32xf32> to vector<32x1xf32>
    %cst_14 = arith.constant 9.99999996E-13 : f32
    %28 = vector.broadcast %cst_14 : f32 to vector<32x1xf32>
    %29 = arith.maximumf %27, %28 : vector<32x1xf32>
    %30 = math.rsqrt %29 : vector<32x1xf32>
    %cst_15 = arith.constant dense<0.000000e+00> : vector<32x48xf32>
    %31 = tpu.matmul %21, %22, %cst_15 {dimension_numbers = #tpu.dot_dimension_numbers<[1], [0], [0], [1], [0, 0, 1, 1], [], []>} : vector<32x48xf32>, vector<48x48xf32>, vector<32x48xf32> -> vector<32x48xf32>
    %32 = vector.broadcast %30 : vector<32x1xf32> to vector<32x48xf32>
    %33 = arith.mulf %32, %31 : vector<32x48xf32>
    %cst_16 = arith.constant dense<0.000000e+00> : vector<32x48xf32>
    %34 = tpu.matmul %20, %33, %cst_16 {dimension_numbers = #tpu.dot_dimension_numbers<[1], [0], [0], [1], [0, 0, 1, 1], [], []>} : vector<32x32xf32>, vector<32x48xf32>, vector<32x48xf32> -> vector<32x48xf32>
    %35 = vector.broadcast %30 : vector<32x1xf32> to vector<32x48xf32>
    %36 = arith.mulf %35, %34 : vector<32x48xf32>
    %37 = vector.broadcast %23 : vector<1x48xf32> to vector<32x48xf32>
    %38 = arith.addf %36, %37 : vector<32x48xf32>
    %cst_17 = arith.constant 0.000000e+00 : f32
    %39 = vector.broadcast %cst_17 : f32 to vector<32x48xf32>
    %40 = arith.maximumf %38, %39 : vector<32x48xf32>
    %cst_18 = arith.constant dense<0.000000e+00> : vector<32x8xf32>
    %41 = tpu.matmul %40, %24, %cst_18 {dimension_numbers = #tpu.dot_dimension_numbers<[1], [0], [0], [1], [0, 0, 1, 1], [], []>} : vector<32x48xf32>, vector<48x8xf32>, vector<32x8xf32> -> vector<32x8xf32>
    %42 = vector.broadcast %30 : vector<32x1xf32> to vector<32x8xf32>
    %43 = arith.mulf %42, %41 : vector<32x8xf32>
    %cst_19 = arith.constant dense<0.000000e+00> : vector<32x8xf32>
    %44 = tpu.matmul %20, %43, %cst_19 {dimension_numbers = #tpu.dot_dimension_numbers<[1], [0], [0], [1], [0, 0, 1, 1], [], []>} : vector<32x32xf32>, vector<32x8xf32>, vector<32x8xf32> -> vector<32x8xf32>
    %45 = vector.broadcast %30 : vector<32x1xf32> to vector<32x8xf32>
    %46 = arith.mulf %45, %44 : vector<32x8xf32>
    %47 = vector.broadcast %25 : vector<1x8xf32> to vector<32x8xf32>
    %48 = arith.addf %46, %47 : vector<32x8xf32>
    %49 = arith.mulf %48, %48 : vector<32x8xf32>
    %cst_20 = arith.constant dense<0.000000e+00> : vector<32xf32>
    %50 = vector.multi_reduction <add>, %49, %cst_20 [1] : vector<32x8xf32> to vector<32xf32>
    %51 = vector.shape_cast %50 : vector<32xf32> to vector<32x1xf32>
    %cst_21 = arith.constant dense<0.000000e+00> : vector<32x32xf32>
    %52 = tpu.matmul %48, %48, %cst_21 {dimension_numbers = #tpu.dot_dimension_numbers<[1], [1], [0], [0], [0, 0, 1, 0], [], []>} : vector<32x8xf32>, vector<32x8xf32>, vector<32x32xf32> -> vector<32x32xf32>
    %53 = tpu.transpose %51, [1, 0] : vector<32x1xf32> -> vector<1x32xf32>
    %54 = vector.broadcast %51 : vector<32x1xf32> to vector<32x32xf32>
    %55 = vector.broadcast %53 : vector<1x32xf32> to vector<32x32xf32>
    %56 = arith.addf %54, %55 : vector<32x32xf32>
    %cst_22 = arith.constant 2.000000e+00 : f32
    %57 = vector.broadcast %cst_22 : f32 to vector<32x32xf32>
    %58 = arith.mulf %57, %52 : vector<32x32xf32>
    %59 = arith.subf %56, %58 : vector<32x32xf32>
    %cst_23 = arith.constant 0.000000e+00 : f32
    %60 = vector.broadcast %cst_23 : f32 to vector<32x32xf32>
    %61 = arith.maximumf %59, %60 : vector<32x32xf32>
    %c0_24 = arith.constant 0 : index
    %62 = memref.load %arg0[%c0_24] : memref<2xf32, #tpu.memory_space<smem>>
    %cst_25 = arith.constant -5.000000e+00 : f32
    %cst_26 = arith.constant 5.000000e+00 : f32
    %63 = arith.maximumf %cst_25, %62 : f32
    %64 = arith.minimumf %cst_26, %63 : f32
    %65 = math.exp %64 : f32
    %c0_27 = arith.constant 0 : index
    %c0_28 = arith.constant 0 : index
    %c0_29 = arith.constant 0 : index
    %66 = vector.load %arg3[%c0_27, %c0_28, %c0_29] : memref<2x32x32xf32, #tpu.memory_space<vmem>>, vector<1x32x32xf32>
    %67 = vector.shape_cast %66 : vector<1x32x32xf32> to vector<32x32xf32>
    %cst_30 = arith.constant 9.99999993E-9 : f32
    %68 = vector.broadcast %cst_30 : f32 to vector<32x32xf32>
    %69 = arith.addf %67, %68 : vector<32x32xf32>
    %70 = math.log %69 : vector<32x32xf32>
    %cst_31 = arith.constant 0.000000e+00 : f32
    %71 = vector.broadcast %cst_31 : f32 to vector<32x32xf32>
    %72 = arith.subf %71, %70 : vector<32x32xf32>
    %73 = math.log %72 : vector<32x32xf32>
    %74 = vector.broadcast %65 : f32 to vector<32x32xf32>
    %75 = arith.mulf %61, %74 : vector<32x32xf32>
    %76 = arith.subf %73, %75 : vector<32x32xf32>
    %cst_32 = arith.constant dense<0xFF800000> : vector<32xf32>
    %77 = vector.multi_reduction <maximumf>, %76, %cst_32 [1] : vector<32x32xf32> to vector<32xf32>
    %78 = vector.shape_cast %77 : vector<32xf32> to vector<32x1xf32>
    %79 = vector.broadcast %78 : vector<32x1xf32> to vector<32x32xf32>
    %80 = arith.cmpf oeq, %76, %79 : vector<32x32xf32>
    %cst_33 = arith.constant 3.200000e+01 : f32
    %81 = vector.broadcast %cst_33 : f32 to vector<32x32xf32>
    %82 = arith.select %80, %2, %81 : vector<32x32xi1>, vector<32x32xf32>
    %cst_34 = arith.constant dense<0x7F800000> : vector<32xf32>
    %83 = vector.multi_reduction <minimumf>, %82, %cst_34 [1] : vector<32x32xf32> to vector<32xf32>
    %84 = vector.shape_cast %83 : vector<32xf32> to vector<32x1xf32>
    %85 = arith.fptosi %84 : vector<32x1xf32> to vector<32x1xi32>
    %c0_35 = arith.constant 0 : index
    %c0_36 = arith.constant 0 : index
    %86 = vector.load %arg13[%c0_35, %c0_36] : memref<32x8xf32, #tpu.memory_space<vmem>>, vector<32x1xf32>
    tpu.vector_store %arg13[%c0_35, %c0_36], %78 {strides = array<i32>} : memref<32x8xf32, #tpu.memory_space<vmem>>, vector<32x1xf32>,
    %87 = vector.broadcast %85 : vector<32x1xi32> to vector<32x32xi32>
    %88 = arith.cmpi eq, %1, %87 : vector<32x32xi32>
    %cst_37 = arith.constant -1.000000e+30 : f32
    %89 = vector.broadcast %cst_37 : f32 to vector<32x32xf32>
    %90 = arith.select %88, %89, %76 : vector<32x32xi1>, vector<32x32xf32>
    %cst_38 = arith.constant dense<0xFF800000> : vector<32xf32>
    %91 = vector.multi_reduction <maximumf>, %90, %cst_38 [1] : vector<32x32xf32> to vector<32xf32>
    %92 = vector.shape_cast %91 : vector<32xf32> to vector<32x1xf32>
    %93 = vector.broadcast %92 : vector<32x1xf32> to vector<32x32xf32>
    %94 = arith.cmpf oeq, %90, %93 : vector<32x32xf32>
    %cst_39 = arith.constant 3.200000e+01 : f32
    %95 = vector.broadcast %cst_39 : f32 to vector<32x32xf32>
    %96 = arith.select %94, %2, %95 : vector<32x32xi1>, vector<32x32xf32>
    %cst_40 = arith.constant dense<0x7F800000> : vector<32xf32>
    %97 = vector.multi_reduction <minimumf>, %96, %cst_40 [1] : vector<32x32xf32> to vector<32xf32>
    %98 = vector.shape_cast %97 : vector<32xf32> to vector<32x1xf32>
    %99 = arith.fptosi %98 : vector<32x1xf32> to vector<32x1xi32>
    %c0_41 = arith.constant 0 : index
    %c1 = arith.constant 1 : index
    %100 = vector.load %arg13[%c0_41, %c1] : memref<32x8xf32, #tpu.memory_space<vmem>>, vector<32x1xf32>
    tpu.vector_store %arg13[%c0_41, %c1], %92 {strides = array<i32>} : memref<32x8xf32, #tpu.memory_space<vmem>>, vector<32x1xf32>,
    %101 = vector.broadcast %99 : vector<32x1xi32> to vector<32x32xi32>
    %102 = arith.cmpi eq, %1, %101 : vector<32x32xi32>
    %cst_42 = arith.constant -1.000000e+30 : f32
    %103 = vector.broadcast %cst_42 : f32 to vector<32x32xf32>
    %104 = arith.select %102, %103, %90 : vector<32x32xi1>, vector<32x32xf32>
    %cst_43 = arith.constant dense<0xFF800000> : vector<32xf32>
    %105 = vector.multi_reduction <maximumf>, %104, %cst_43 [1] : vector<32x32xf32> to vector<32xf32>
    %106 = vector.shape_cast %105 : vector<32xf32> to vector<32x1xf32>
    %107 = vector.broadcast %106 : vector<32x1xf32> to vector<32x32xf32>
    %108 = arith.cmpf oeq, %104, %107 : vector<32x32xf32>
    %cst_44 = arith.constant 3.200000e+01 : f32
    %109 = vector.broadcast %cst_44 : f32 to vector<32x32xf32>
    %110 = arith.select %108, %2, %109 : vector<32x32xi1>, vector<32x32xf32>
    %cst_45 = arith.constant dense<0x7F800000> : vector<32xf32>
    %111 = vector.multi_reduction <minimumf>, %110, %cst_45 [1] : vector<32x32xf32> to vector<32xf32>
    %112 = vector.shape_cast %111 : vector<32xf32> to vector<32x1xf32>
    %113 = arith.fptosi %112 : vector<32x1xf32> to vector<32x1xi32>
    %c0_46 = arith.constant 0 : index
    %c2 = arith.constant 2 : index
    %114 = vector.load %arg13[%c0_46, %c2] : memref<32x8xf32, #tpu.memory_space<vmem>>, vector<32x1xf32>
    tpu.vector_store %arg13[%c0_46, %c2], %106 {strides = array<i32>} : memref<32x8xf32, #tpu.memory_space<vmem>>, vector<32x1xf32>,
    %115 = vector.broadcast %113 : vector<32x1xi32> to vector<32x32xi32>
    %116 = arith.cmpi eq, %1, %115 : vector<32x32xi32>
    %cst_47 = arith.constant -1.000000e+30 : f32
    %117 = vector.broadcast %cst_47 : f32 to vector<32x32xf32>
    %118 = arith.select %116, %117, %104 : vector<32x32xi1>, vector<32x32xf32>
    %cst_48 = arith.constant dense<0xFF800000> : vector<32xf32>
    %119 = vector.multi_reduction <maximumf>, %118, %cst_48 [1] : vector<32x32xf32> to vector<32xf32>
    %120 = vector.shape_cast %119 : vector<32xf32> to vector<32x1xf32>
    %121 = vector.broadcast %120 : vector<32x1xf32> to vector<32x32xf32>
    %122 = arith.cmpf oeq, %118, %121 : vector<32x32xf32>
    %cst_49 = arith.constant 3.200000e+01 : f32
    %123 = vector.broadcast %cst_49 : f32 to vector<32x32xf32>
    %124 = arith.select %122, %2, %123 : vector<32x32xi1>, vector<32x32xf32>
    %cst_50 = arith.constant dense<0x7F800000> : vector<32xf32>
    %125 = vector.multi_reduction <minimumf>, %124, %cst_50 [1] : vector<32x32xf32> to vector<32xf32>
    %126 = vector.shape_cast %125 : vector<32xf32> to vector<32x1xf32>
    %127 = arith.fptosi %126 : vector<32x1xf32> to vector<32x1xi32>
    %c0_51 = arith.constant 0 : index
    %c3 = arith.constant 3 : index
    %128 = vector.load %arg13[%c0_51, %c3] : memref<32x8xf32, #tpu.memory_space<vmem>>, vector<32x1xf32>
    tpu.vector_store %arg13[%c0_51, %c3], %120 {strides = array<i32>} : memref<32x8xf32, #tpu.memory_space<vmem>>, vector<32x1xf32>,
    %c0_52 = arith.constant 0 : index
    %c0_53 = arith.constant 0 : index
    %129 = vector.load %arg8[%c0_52, %c0_53] : memref<48x48xf32, #tpu.memory_space<vmem>>, vector<48x48xf32>
    %c0_54 = arith.constant 0 : index
    %c0_55 = arith.constant 0 : index
    %130 = vector.load %arg9[%c0_54, %c0_55] : memref<1x48xf32, #tpu.memory_space<vmem>>, vector<1x48xf32>
    %c0_56 = arith.constant 0 : index
    %c0_57 = arith.constant 0 : index
    %131 = vector.load %arg10[%c0_56, %c0_57] : memref<48x8xf32, #tpu.memory_space<vmem>>, vector<48x8xf32>
    %c0_58 = arith.constant 0 : index
    %c0_59 = arith.constant 0 : index
    %132 = vector.load %arg11[%c0_58, %c0_59] : memref<1x8xf32, #tpu.memory_space<vmem>>, vector<1x8xf32>
    %133 = vector.broadcast %85 : vector<32x1xi32> to vector<32x32xi32>
    %134 = arith.cmpi eq, %1, %133 : vector<32x32xi32>
    %135 = arith.ori %3, %134 : vector<32x32xi1>
    %136 = vector.broadcast %99 : vector<32x1xi32> to vector<32x32xi32>
    %137 = arith.cmpi eq, %1, %136 : vector<32x32xi32>
    %138 = arith.ori %135, %137 : vector<32x32xi1>
    %139 = vector.broadcast %113 : vector<32x1xi32> to vector<32x32xi32>
    %140 = arith.cmpi eq, %1, %139 : vector<32x32xi32>
    %141 = arith.ori %138, %140 : vector<32x32xi1>
    %142 = vector.broadcast %127 : vector<32x1xi32> to vector<32x32xi32>
    %143 = arith.cmpi eq, %1, %142 : vector<32x32xi32>
    %144 = arith.ori %141, %143 : vector<32x32xi1>
    %145 = arith.extui %144 : vector<32x32xi1> to vector<32x32xi32>
    %146 = arith.sitofp %145 : vector<32x32xi32> to vector<32x32xf32>
    %cst_60 = arith.constant dense<0.000000e+00> : vector<32xf32>
    %147 = vector.multi_reduction <add>, %146, %cst_60 [1] : vector<32x32xf32> to vector<32xf32>
    %148 = vector.shape_cast %147 : vector<32xf32> to vector<32x1xf32>
    %cst_61 = arith.constant 9.99999996E-13 : f32
    %149 = vector.broadcast %cst_61 : f32 to vector<32x1xf32>
    %150 = arith.maximumf %148, %149 : vector<32x1xf32>
    %151 = math.rsqrt %150 : vector<32x1xf32>
    %cst_62 = arith.constant dense<0.000000e+00> : vector<32x48xf32>
    %152 = tpu.matmul %40, %129, %cst_62 {dimension_numbers = #tpu.dot_dimension_numbers<[1], [0], [0], [1], [0, 0, 1, 1], [], []>} : vector<32x48xf32>, vector<48x48xf32>, vector<32x48xf32> -> vector<32x48xf32>
    %153 = vector.broadcast %151 : vector<32x1xf32> to vector<32x48xf32>
    %154 = arith.mulf %153, %152 : vector<32x48xf32>
    %cst_63 = arith.constant dense<0.000000e+00> : vector<32x48xf32>
    %155 = tpu.matmul %146, %154, %cst_63 {dimension_numbers = #tpu.dot_dimension_numbers<[1], [0], [0], [1], [0, 0, 1, 1], [], []>} : vector<32x32xf32>, vector<32x48xf32>, vector<32x48xf32> -> vector<32x48xf32>
    %156 = vector.broadcast %151 : vector<32x1xf32> to vector<32x48xf32>
    %157 = arith.mulf %156, %155 : vector<32x48xf32>
    %158 = vector.broadcast %130 : vector<1x48xf32> to vector<32x48xf32>
    %159 = arith.addf %157, %158 : vector<32x48xf32>
    %cst_64 = arith.constant 0.000000e+00 : f32
    %160 = vector.broadcast %cst_64 : f32 to vector<32x48xf32>
    %161 = arith.maximumf %159, %160 : vector<32x48xf32>
    %cst_65 = arith.constant dense<0.000000e+00> : vector<32x8xf32>
    %162 = tpu.matmul %161, %131, %cst_65 {dimension_numbers = #tpu.dot_dimension_numbers<[1], [0], [0], [1], [0, 0, 1, 1], [], []>} : vector<32x48xf32>, vector<48x8xf32>, vector<32x8xf32> -> vector<32x8xf32>
    %163 = vector.broadcast %151 : vector<32x1xf32> to vector<32x8xf32>
    %164 = arith.mulf %163, %162 : vector<32x8xf32>
    %cst_66 = arith.constant dense<0.000000e+00> : vector<32x8xf32>
    %165 = tpu.matmul %146, %164, %cst_66 {dimension_numbers = #tpu.dot_dimension_numbers<[1], [0], [0], [1], [0, 0, 1, 1], [], []>} : vector<32x32xf32>, vector<32x8xf32>, vector<32x8xf32> -> vector<32x8xf32>
    %166 = vector.broadcast %151 : vector<32x1xf32> to vector<32x8xf32>
    %167 = arith.mulf %166, %165 : vector<32x8xf32>
    %168 = vector.broadcast %132 : vector<1x8xf32> to vector<32x8xf32>
    %169 = arith.addf %167, %168 : vector<32x8xf32>
    %170 = arith.mulf %169, %169 : vector<32x8xf32>
    %cst_67 = arith.constant dense<0.000000e+00> : vector<32xf32>
    %171 = vector.multi_reduction <add>, %170, %cst_67 [1] : vector<32x8xf32> to vector<32xf32>
    %172 = vector.shape_cast %171 : vector<32xf32> to vector<32x1xf32>
    %cst_68 = arith.constant dense<0.000000e+00> : vector<32x32xf32>
    %173 = tpu.matmul %169, %169, %cst_68 {dimension_numbers = #tpu.dot_dimension_numbers<[1], [1], [0], [0], [0, 0, 1, 0], [], []>} : vector<32x8xf32>, vector<32x8xf32>, vector<32x32xf32> -> vector<32x32xf32>
    %174 = tpu.transpose %172, [1, 0] : vector<32x1xf32> -> vector<1x32xf32>
    %175 = vector.broadcast %172 : vector<32x1xf32> to vector<32x32xf32>
    %176 = vector.broadcast %174 : vector<1x32xf32> to vector<32x32xf32>
    %177 = arith.addf %175, %176 : vector<32x32xf32>
    %cst_69 = arith.constant 2.000000e+00 : f32
    %178 = vector.broadcast %cst_69 : f32 to vector<32x32xf32>
    %179 = arith.mulf %178, %173 : vector<32x32xf32>
    %180 = arith.subf %177, %179 : vector<32x32xf32>
    %cst_70 = arith.constant 0.000000e+00 : f32
    %181 = vector.broadcast %cst_70 : f32 to vector<32x32xf32>
    %182 = arith.maximumf %180, %181 : vector<32x32xf32>
    %c1_71 = arith.constant 1 : index
    %183 = memref.load %arg0[%c1_71] : memref<2xf32, #tpu.memory_space<smem>>
    %cst_72 = arith.constant -5.000000e+00 : f32
    %cst_73 = arith.constant 5.000000e+00 : f32
    %184 = arith.maximumf %cst_72, %183 : f32
    %185 = arith.minimumf %cst_73, %184 : f32
    %186 = math.exp %185 : f32
    %c1_74 = arith.constant 1 : index
    %c0_75 = arith.constant 0 : index
    %c0_76 = arith.constant 0 : index
    %187 = vector.load %arg3[%c1_74, %c0_75, %c0_76] : memref<2x32x32xf32, #tpu.memory_space<vmem>>, vector<1x32x32xf32>
    %188 = vector.shape_cast %187 : vector<1x32x32xf32> to vector<32x32xf32>
    %cst_77 = arith.constant 9.99999993E-9 : f32
    %189 = vector.broadcast %cst_77 : f32 to vector<32x32xf32>
    %190 = arith.addf %188, %189 : vector<32x32xf32>
    %191 = math.log %190 : vector<32x32xf32>
    %cst_78 = arith.constant 0.000000e+00 : f32
    %192 = vector.broadcast %cst_78 : f32 to vector<32x32xf32>
    %193 = arith.subf %192, %191 : vector<32x32xf32>
    %194 = math.log %193 : vector<32x32xf32>
    %195 = vector.broadcast %186 : f32 to vector<32x32xf32>
    %196 = arith.mulf %182, %195 : vector<32x32xf32>
    %197 = arith.subf %194, %196 : vector<32x32xf32>
    %cst_79 = arith.constant dense<0xFF800000> : vector<32xf32>
    %198 = vector.multi_reduction <maximumf>, %197, %cst_79 [1] : vector<32x32xf32> to vector<32xf32>
    %199 = vector.shape_cast %198 : vector<32xf32> to vector<32x1xf32>
    %200 = vector.broadcast %199 : vector<32x1xf32> to vector<32x32xf32>
    %201 = arith.cmpf oeq, %197, %200 : vector<32x32xf32>
    %cst_80 = arith.constant 3.200000e+01 : f32
    %202 = vector.broadcast %cst_80 : f32 to vector<32x32xf32>
    %203 = arith.select %201, %2, %202 : vector<32x32xi1>, vector<32x32xf32>
    %cst_81 = arith.constant dense<0x7F800000> : vector<32xf32>
    %204 = vector.multi_reduction <minimumf>, %203, %cst_81 [1] : vector<32x32xf32> to vector<32xf32>
    %205 = vector.shape_cast %204 : vector<32xf32> to vector<32x1xf32>
    %206 = arith.fptosi %205 : vector<32x1xf32> to vector<32x1xi32>
    %c0_82 = arith.constant 0 : index
    %c4 = arith.constant 4 : index
    %207 = vector.load %arg13[%c0_82, %c4] : memref<32x8xf32, #tpu.memory_space<vmem>>, vector<32x1xf32>
    tpu.vector_store %arg13[%c0_82, %c4], %199 {strides = array<i32>} : memref<32x8xf32, #tpu.memory_space<vmem>>, vector<32x1xf32>,
    %c0_83 = arith.constant 0 : index
    %c0_84 = arith.constant 0 : index
    %208 = vector.load %arg14[%c0_83, %c0_84] : memref<32x4xi32, #tpu.memory_space<vmem>>, vector<32x1xi32>
    tpu.vector_store %arg14[%c0_83, %c0_84], %206 {strides = array<i32>} : memref<32x4xi32, #tpu.memory_space<vmem>>, vector<32x1xi32>,
    %209 = vector.broadcast %206 : vector<32x1xi32> to vector<32x32xi32>
    %210 = arith.cmpi eq, %1, %209 : vector<32x32xi32>
    %cst_85 = arith.constant -1.000000e+30 : f32
    %211 = vector.broadcast %cst_85 : f32 to vector<32x32xf32>
    %212 = arith.select %210, %211, %197 : vector<32x32xi1>, vector<32x32xf32>
    %cst_86 = arith.constant dense<0xFF800000> : vector<32xf32>
    %213 = vector.multi_reduction <maximumf>, %212, %cst_86 [1] : vector<32x32xf32> to vector<32xf32>
    %214 = vector.shape_cast %213 : vector<32xf32> to vector<32x1xf32>
    %215 = vector.broadcast %214 : vector<32x1xf32> to vector<32x32xf32>
    %216 = arith.cmpf oeq, %212, %215 : vector<32x32xf32>
    %cst_87 = arith.constant 3.200000e+01 : f32
    %217 = vector.broadcast %cst_87 : f32 to vector<32x32xf32>
    %218 = arith.select %216, %2, %217 : vector<32x32xi1>, vector<32x32xf32>
    %cst_88 = arith.constant dense<0x7F800000> : vector<32xf32>
    %219 = vector.multi_reduction <minimumf>, %218, %cst_88 [1] : vector<32x32xf32> to vector<32xf32>
    %220 = vector.shape_cast %219 : vector<32xf32> to vector<32x1xf32>
    %221 = arith.fptosi %220 : vector<32x1xf32> to vector<32x1xi32>
    %c0_89 = arith.constant 0 : index
    %c5 = arith.constant 5 : index
    %222 = vector.load %arg13[%c0_89, %c5] : memref<32x8xf32, #tpu.memory_space<vmem>>, vector<32x1xf32>
    tpu.vector_store %arg13[%c0_89, %c5], %214 {strides = array<i32>} : memref<32x8xf32, #tpu.memory_space<vmem>>, vector<32x1xf32>,
    %c0_90 = arith.constant 0 : index
    %c1_91 = arith.constant 1 : index
    %223 = vector.load %arg14[%c0_90, %c1_91] : memref<32x4xi32, #tpu.memory_space<vmem>>, vector<32x1xi32>
    tpu.vector_store %arg14[%c0_90, %c1_91], %221 {strides = array<i32>} : memref<32x4xi32, #tpu.memory_space<vmem>>, vector<32x1xi32>,
    %224 = vector.broadcast %221 : vector<32x1xi32> to vector<32x32xi32>
    %225 = arith.cmpi eq, %1, %224 : vector<32x32xi32>
    %cst_92 = arith.constant -1.000000e+30 : f32
    %226 = vector.broadcast %cst_92 : f32 to vector<32x32xf32>
    %227 = arith.select %225, %226, %212 : vector<32x32xi1>, vector<32x32xf32>
    %cst_93 = arith.constant dense<0xFF800000> : vector<32xf32>
    %228 = vector.multi_reduction <maximumf>, %227, %cst_93 [1] : vector<32x32xf32> to vector<32xf32>
    %229 = vector.shape_cast %228 : vector<32xf32> to vector<32x1xf32>
    %230 = vector.broadcast %229 : vector<32x1xf32> to vector<32x32xf32>
    %231 = arith.cmpf oeq, %227, %230 : vector<32x32xf32>
    %cst_94 = arith.constant 3.200000e+01 : f32
    %232 = vector.broadcast %cst_94 : f32 to vector<32x32xf32>
    %233 = arith.select %231, %2, %232 : vector<32x32xi1>, vector<32x32xf32>
    %cst_95 = arith.constant dense<0x7F800000> : vector<32xf32>
    %234 = vector.multi_reduction <minimumf>, %233, %cst_95 [1] : vector<32x32xf32> to vector<32xf32>
    %235 = vector.shape_cast %234 : vector<32xf32> to vector<32x1xf32>
    %236 = arith.fptosi %235 : vector<32x1xf32> to vector<32x1xi32>
    %c0_96 = arith.constant 0 : index
    %c6 = arith.constant 6 : index
    %237 = vector.load %arg13[%c0_96, %c6] : memref<32x8xf32, #tpu.memory_space<vmem>>, vector<32x1xf32>
    tpu.vector_store %arg13[%c0_96, %c6], %229 {strides = array<i32>} : memref<32x8xf32, #tpu.memory_space<vmem>>, vector<32x1xf32>,
    %c0_97 = arith.constant 0 : index
    %c2_98 = arith.constant 2 : index
    %238 = vector.load %arg14[%c0_97, %c2_98] : memref<32x4xi32, #tpu.memory_space<vmem>>, vector<32x1xi32>
    tpu.vector_store %arg14[%c0_97, %c2_98], %236 {strides = array<i32>} : memref<32x4xi32, #tpu.memory_space<vmem>>, vector<32x1xi32>,
    %239 = vector.broadcast %236 : vector<32x1xi32> to vector<32x32xi32>
    %240 = arith.cmpi eq, %1, %239 : vector<32x32xi32>
    %cst_99 = arith.constant -1.000000e+30 : f32
    %241 = vector.broadcast %cst_99 : f32 to vector<32x32xf32>
    %242 = arith.select %240, %241, %227 : vector<32x32xi1>, vector<32x32xf32>
    %cst_100 = arith.constant dense<0xFF800000> : vector<32xf32>
    %243 = vector.multi_reduction <maximumf>, %242, %cst_100 [1] : vector<32x32xf32> to vector<32xf32>
    %244 = vector.shape_cast %243 : vector<32xf32> to vector<32x1xf32>
    %245 = vector.broadcast %244 : vector<32x1xf32> to vector<32x32xf32>
    %246 = arith.cmpf oeq, %242, %245 : vector<32x32xf32>
    %cst_101 = arith.constant 3.200000e+01 : f32
    %247 = vector.broadcast %cst_101 : f32 to vector<32x32xf32>
    %248 = arith.select %246, %2, %247 : vector<32x32xi1>, vector<32x32xf32>
    %cst_102 = arith.constant dense<0x7F800000> : vector<32xf32>
    %249 = vector.multi_reduction <minimumf>, %248, %cst_102 [1] : vector<32x32xf32> to vector<32xf32>
    %250 = vector.shape_cast %249 : vector<32xf32> to vector<32x1xf32>
    %251 = arith.fptosi %250 : vector<32x1xf32> to vector<32x1xi32>
    %c0_103 = arith.constant 0 : index
    %c7 = arith.constant 7 : index
    %252 = vector.load %arg13[%c0_103, %c7] : memref<32x8xf32, #tpu.memory_space<vmem>>, vector<32x1xf32>
    tpu.vector_store %arg13[%c0_103, %c7], %244 {strides = array<i32>} : memref<32x8xf32, #tpu.memory_space<vmem>>, vector<32x1xf32>,
    %c0_104 = arith.constant 0 : index
    %c3_105 = arith.constant 3 : index
    %253 = vector.load %arg14[%c0_104, %c3_105] : memref<32x4xi32, #tpu.memory_space<vmem>>, vector<32x1xi32>
    tpu.vector_store %arg14[%c0_104, %c3_105], %251 {strides = array<i32>} : memref<32x4xi32, #tpu.memory_space<vmem>>, vector<32x1xi32>,
    %c0_106 = arith.constant 0 : index
    %c0_107 = arith.constant 0 : index
    %254 = vector.load %arg12[%c0_106, %c0_107] : memref<32x48xf32, #tpu.memory_space<vmem>>, vector<32x48xf32>
    tpu.vector_store %arg12[%c0_106, %c0_107], %161 {strides = array<i32>} : memref<32x48xf32, #tpu.memory_space<vmem>>, vector<32x48xf32>,
    return
  }
}

</mosaic_0001>

<llo_original>
// kernel: dgm_forward.1
$region0: #{dgm_forward.1}
  #allocation0 [shape = 'u32[]', space=smem, size = 0x4, offset = 0x4, fixed_abs, tag = 'smem constant byte address 0x4 - core index']
  #allocation1 [shape = 'u32[72,128]{1,0:T(1,128)}', space=vmem, size = 0x9000, scoped, tag = 'internal scratch']
  %s0 = inlined_call_operand.vmem [shape: f32[2], index: 0, kind: input, shape index: {}]
  %s1 = inlined_call_operand.vmem [shape: s32[2,64], index: 1, kind: input, shape index: {}]
  %s2 = inlined_call_operand.vmem [shape: f32[32,48], index: 2, kind: input, shape index: {}]
  %s3 = inlined_call_operand.vmem [shape: f32[2,32,32], index: 3, kind: input, shape index: {}]
  %s4 = inlined_call_operand.vmem [shape: f32[48,48], index: 4, kind: input, shape index: {}]
  %s5 = inlined_call_operand.vmem [shape: f32[1,48], index: 5, kind: input, shape index: {}]
  %s6 = inlined_call_operand.vmem [shape: f32[48,8], index: 6, kind: input, shape index: {}]
  %s7 = inlined_call_operand.vmem [shape: f32[1,8], index: 7, kind: input, shape index: {}]
  %s8 = inlined_call_operand.vmem [shape: f32[48,48], index: 8, kind: input, shape index: {}]
  %s9 = inlined_call_operand.vmem [shape: f32[1,48], index: 9, kind: input, shape index: {}]
  %s10 = inlined_call_operand.vmem [shape: f32[48,8], index: 10, kind: input, shape index: {}]
  %s11 = inlined_call_operand.vmem [shape: f32[1,8], index: 11, kind: input, shape index: {}]
  %s12 = inlined_call_operand.vmem [shape: f32[32,48], index: 12, kind: output, shape index: {0}]
  %s13 = inlined_call_operand.vmem [shape: f32[32,8], index: 13, kind: output, shape index: {1}]
  %s14 = inlined_call_operand.vmem [shape: s32[32,4], index: 14, kind: output, shape index: {2}]
  %15 = xla_tuple %s12, %s13, %s14
  %s16 = sld [smem:[#allocation0]]
  $region78: #{dgm_forward.1} parent=0
    _
  %s18 = ssub.s32 1, %s16
  %s19 = scalar_select 0, %s18, %s16
  $region1: #{dgm_forward.1} parent=0
    #allocation2 [shape = 'u8[512]{0}', space=smem, size = 0x200, scoped, tag = 'input window, operand 0, single buffered']
    #allocation3 [shape = 's32[1]{0}', space=sflag, size = 0x4, scoped, tag = 'scoped memory for dgm_forward.1']
    %20 = vsyncpa [#allocation3], 0
    // Predicated region
    $region2: #{dgm_forward.1} parent=1 // pred_check
      _
    $region3: #{dgm_forward.1} parent=1 // pred_check_branch
      %22 = sbr.rel (0) target = $region5
    $region4: #{dgm_forward.1} parent=1 // pred_region
      %24 = vsyncadd [#allocation3], 0
      %s26 = sshll.u32 %s0, 4
      %s27 = int_to_ptr.vmem [resolvable:$true] %s26
      %29 = dma.vmem_to_smem %s27, 16, [#allocation2], [#allocation3]
    $region5: #{dgm_forward.1} parent=1 // pred_fallthru
      _
    // Predicated region
    $region6: #{dgm_forward.1} parent=1 // pred_check
      _
    $region7: #{dgm_forward.1} parent=1 // pred_check_branch
      %31 = sbr.rel (0) target = $region9
    $region8: #{dgm_forward.1} parent=1 // pred_region
      _
    $region9: #{dgm_forward.1} parent=1 // pred_fallthru
      _
    // Predicated region
    $region10: #{dgm_forward.1} parent=1 // pred_check
      _
    $region11: #{dgm_forward.1} parent=1 // pred_check_branch
      %33 = sbr.rel (0) target = $region13
    $region12: #{dgm_forward.1} parent=1 // pred_region
      _
    $region13: #{dgm_forward.1} parent=1 // pred_fallthru
      _
    // Predicated region
    $region14: #{dgm_forward.1} parent=1 // pred_check
      _
    $region15: #{dgm_forward.1} parent=1 // pred_check_branch
      %35 = sbr.rel (0) target = $region17
    $region16: #{dgm_forward.1} parent=1 // pred_region
      _
    $region17: #{dgm_forward.1} parent=1 // pred_fallthru
      _
    // Predicated region
    $region18: #{dgm_forward.1} parent=1 // pred_check
      _
    $region19: #{dgm_forward.1} parent=1 // pred_check_branch
      %37 = sbr.rel (0) target = $region21
    $region20: #{dgm_forward.1} parent=1 // pred_region
      _
    $region21: #{dgm_forward.1} parent=1 // pred_fallthru
      _
    // Predicated region
    $region22: #{dgm_forward.1} parent=1 // pred_check
      _
    $region23: #{dgm_forward.1} parent=1 // pred_check_branch
      %39 = sbr.rel (0) target = $region25
    $region24: #{dgm_forward.1} parent=1 // pred_region
      _
    $region25: #{dgm_forward.1} parent=1 // pred_fallthru
      _
    // Predicated region
    $region26: #{dgm_forward.1} parent=1 // pred_check
      _
    $region27: #{dgm_forward.1} parent=1 // pred_check_branch
      %41 = sbr.rel (0) target = $region29
    $region28: #{dgm_forward.1} parent=1 // pred_region
      _
    $region29: #{dgm_forward.1} parent=1 // pred_fallthru
      _
    // Predicated region
    $region30: #{dgm_forward.1} parent=1 // pred_check
      _
    $region31: #{dgm_forward.1} parent=1 // pred_check_branch
      %43 = sbr.rel (0) target = $region33
    $region32: #{dgm_forward.1} parent=1 // pred_region
      _
    $region33: #{dgm_forward.1} parent=1 // pred_fallthru
      _
    // Predicated region
    $region34: #{dgm_forward.1} parent=1 // pred_check
      _
    $region35: #{dgm_forward.1} parent=1 // pred_check_branch
      %45 = sbr.rel (0) target = $region37
    $region36: #{dgm_forward.1} parent=1 // pred_region
      _
    $region37: #{dgm_forward.1} parent=1 // pred_fallthru
      _
    // Predicated region
    $region38: #{dgm_forward.1} parent=1 // pred_check
      _
    $region39: #{dgm_forward.1} parent=1 // pred_check_branch
      %47 = sbr.rel (0) target = $region41
    $region40: #{dgm_forward.1} parent=1 // pred_region
      _
    $region41: #{dgm_forward.1} parent=1 // pred_fallthru
      _
    // Predicated region
    $region42: #{dgm_forward.1} parent=1 // pred_check
      _
    $region43: #{dgm_forward.1} parent=1 // pred_check_branch
      %49 = sbr.rel (0) target = $region45
    $region44: #{dgm_forward.1} parent=1 // pred_region
      _
    $region45: #{dgm_forward.1} parent=1 // pred_fallthru
      _
    // Predicated region
    $region46: #{dgm_forward.1} parent=1 // pred_check
      _
    $region47: #{dgm_forward.1} parent=1 // pred_check_branch
      %51 = sbr.rel (0) target = $region49
    $region48: #{dgm_forward.1} parent=1 // pred_region
      _
    $region49: #{dgm_forward.1} parent=1 // pred_fallthru
      _
    // Predicated region
    $region50: #{dgm_forward.1} parent=1 // pred_check
      _
    $region51: #{dgm_forward.1} parent=1 // pred_check_branch
      %53 = sbr.rel (0) target = $region53
    $region52: #{dgm_forward.1} parent=1 // pred_region
      %55 = dma.done [#allocation3], 16
    $region53: #{dgm_forward.1} parent=1 // pred_fallthru
      _
    %56 = sfence
    %v57 = vlaneseq
    %v58 = vshrl.u32 %v57, 7
    %v59 = vadd.s32 %v58, 8
    %v60 = vadd.s32 %v58, 16
    %v61 = vadd.s32 %v58, 24
    %v62 = vlaneseq
    %v63 = vand.u32 %v62, 127
    %v64 = vcvt.s32.f32 %v63
    %vm65 = vcmp.eq.s32.totalorder %v58, %v63
    %vm66 = vcmp.eq.s32.totalorder %v59, %v63
    %vm67 = vcmp.eq.s32.totalorder %v60, %v63
    %vm68 = vcmp.eq.s32.totalorder %v61, %v63
    %v69 = vld [vmem:[%s1] sm:$0x3]
    %v70 = vperm.slane %v69, 0
    %vm71 = vcmp.eq.s32.totalorder %v58, %v70
    %vm72 = vcmp.eq.s32.totalorder %v59, %v70
    %vm73 = vcmp.eq.s32.totalorder %v60, %v70
    %vm74 = vcmp.eq.s32.totalorder %v61, %v70
    %v75 = vsel %vm71, 1, 0
    %v76 = vsel %vm72, 1, 0
    %v77 = vsel %vm73, 1, 0
    %v78 = vsel %vm74, 1, 0
    %v79 = vcvt.s32.f32 %v75
    %v80 = vcvt.s32.f32 %v76
    %v81 = vcvt.s32.f32 %v77
    %v82 = vcvt.s32.f32 %v78
    %v83 = vperm.slane %v69, 1
    %vm84 = vcmp.eq.s32.totalorder %v58, %v83
    %vm85 = vcmp.eq.s32.totalorder %v59, %v83
    %vm86 = vcmp.eq.s32.totalorder %v60, %v83
    %vm87 = vcmp.eq.s32.totalorder %v61, %v83
    %v88 = vsel %vm84, 1, 0
    %v89 = vsel %vm85, 1, 0
    %v90 = vsel %vm86, 1, 0
    %v91 = vsel %vm87, 1, 0
    %v92 = vcvt.s32.f32 %v88
    %v93 = vcvt.s32.f32 %v89
    %v94 = vcvt.s32.f32 %v90
    %v95 = vcvt.s32.f32 %v91
    %vm96 = vcmask 523264
    %v98 = vsel %vm96, %v92, 0
    %v101 = vsel %vm96, %v93, 0
    %v104 = vsel %vm96, %v94, 0
    %v107 = vsel %vm96, %v95, 0
    %v110 = vsel %vm96, %v79, 0
    %v113 = vsel %vm96, %v80, 0
    %v116 = vsel %vm96, %v81, 0
    %v119 = vsel %vm96, %v82, 0
    %121 = vmatpush.xpose.msra.mxu0 0.0
    %122 = vmatpush.xpose.msra.mxu0 0.0
    %123 = vmatpush.xpose.msra.mxu0 0.0
    %124 = vmatpush.xpose.msra.mxu0 0.0
    %125 = vmatpush.xpose.msra.mxu0 0.0
    %126 = vmatpush.xpose.msra.mxu0 0.0
    %127 = vmatpush.xpose.msra.mxu0 0.0
    %128 = vmatpush.xpose.msra.mxu0 0.0
    %129 = vmatpush.xpose.msra.mxu0 0.0
    %130 = vmatpush.xpose.msra.mxu0 0.0
    %131 = vmatpush.xpose.msra.mxu0 0.0
    %132 = vmatpush.xpose.msra.mxu0 0.0
    %133 = vmatpush.xpose.msra.mxu0 %v119
    %134 = vmatpush.xpose.msra.mxu0 %v116
    %135 = vmatpush.xpose.msra.mxu0 %v113
    %136 = vmatpush.xpose.msra.mxu0 %v110
    %137 = vmatmul.f32.gmra.mxu0 %v98
    %v138 = vpop.f32.mrf.mxu0
    %v139 = vadd.f32 0.0, %v138
    %140 = vmatmul.f32.gmra.mxu0 %v101
    %v141 = vpop.f32.mrf.mxu0
    %v142 = vadd.f32 0.0, %v141
    %143 = vmatmul.f32.gmra.mxu0 %v104
    %v144 = vpop.f32.mrf.mxu0
    %v145 = vadd.f32 0.0, %v144
    %146 = vmatmul.f32.gmra.mxu0 %v107
    %v147 = vpop.f32.mrf.mxu0
    %v148 = vadd.f32 0.0, %v147
    %149 = vdwg.mxu0
    %v150 = vmin.f32 %v139, 1.0
    %v151 = vmin.f32 %v142, 1.0
    %v152 = vmin.f32 %v145, 1.0
    %v153 = vmin.f32 %v148, 1.0
    %v154 = vsel %vm65, 1.0, %v150
    %v155 = vsel %vm66, 1.0, %v151
    %v156 = vsel %vm67, 1.0, %v152
    %v157 = vsel %vm68, 1.0, %v153
    %v158 = vld [vmem:[%s2] sm:$0xff]
    %v159 = vld [vmem:[%s2 + $0x8] sm:$0xff]
    %v160 = vld [vmem:[%s2 + $0x10] sm:$0xff]
    %v161 = vld [vmem:[%s2 + $0x18] sm:$0xff]
    %v162 = vld [vmem:[%s4] sm:$0xff]
    %v163 = vld [vmem:[%s4 + $0x8] sm:$0xff]
    %v164 = vld [vmem:[%s4 + $0x10] sm:$0xff]
    %v165 = vld [vmem:[%s4 + $0x18] sm:$0xff]
    %v166 = vld [vmem:[%s4 + $0x20] sm:$0xff]
    %v167 = vld [vmem:[%s4 + $0x28] sm:$0xff]
    %v168 = vld [vmem:[%s5] sm:$0x1]
    %v169 = vld [vmem:[%s6] sm:$0xff]
    %v170 = vld [vmem:[%s6 + $0x8] sm:$0xff]
    %v171 = vld [vmem:[%s6 + $0x10] sm:$0xff]
    %v172 = vld [vmem:[%s6 + $0x18] sm:$0xff]
    %v173 = vld [vmem:[%s6 + $0x20] sm:$0xff]
    %v174 = vld [vmem:[%s6 + $0x28] sm:$0xff]
    %v175 = vld [vmem:[%s7] sm:$0x1]
    %vm176 = vcmask 261120
    %v177 = vsel %vm176, %v154, 0.0
    %178 = vadd.xlane.f32.xlu0 %v177
    %v179 = vpop.xlane.xlu0 %178
    %v180 = vsel %vm176, %v155, 0.0
    %181 = vadd.xlane.f32.xlu0 %v180
    %v182 = vpop.xlane.xlu0 %181
    %v183 = vsel %vm176, %v156, 0.0
    %184 = vadd.xlane.f32.xlu0 %v183
    %v185 = vpop.xlane.xlu0 %184
    %v186 = vsel %vm176, %v157, 0.0
    %187 = vadd.xlane.f32.xlu0 %v186
    %v188 = vpop.xlane.xlu0 %187
    %v189 = vmax.f32 %v179, 1e-12
    %v190 = vmax.f32 %v182, 1e-12
    %v191 = vmax.f32 %v185, 1e-12
    %v192 = vmax.f32 %v188, 1e-12
    %v193 = vrsqrt.pop %v189
    %v194 = vmul.f32 %v193, %v189
    %v195 = vmul.f32 %v194, %v193
    %v196 = vmul.f32 0.5, %v195
    %v197 = vsub.f32 1.5, %v196
    %v198 = vmul.f32 %v193, %v197
    %vm199 = vweird.f32 %v189
    %vm200 = vweird.f32 %v193
    %vm201 = vmor %vm199, %vm200
    %v202 = vsel %vm201, %v193, %v198
    %v203 = vrsqrt.pop %v190
    %v204 = vmul.f32 %v203, %v190
    %v205 = vmul.f32 %v204, %v203
    %v206 = vmul.f32 0.5, %v205
    %v207 = vsub.f32 1.5, %v206
    %v208 = vmul.f32 %v203, %v207
    %vm209 = vweird.f32 %v190
    %vm210 = vweird.f32 %v203
    %vm211 = vmor %vm209, %vm210
    %v212 = vsel %vm211, %v203, %v208
    %v213 = vrsqrt.pop %v191
    %v214 = vmul.f32 %v213, %v191
    %v215 = vmul.f32 %v214, %v213
    %v216 = vmul.f32 0.5, %v215
    %v217 = vsub.f32 1.5, %v216
    %v218 = vmul.f32 %v213, %v217
    %vm219 = vweird.f32 %v191
    %vm220 = vweird.f32 %v213
    %vm221 = vmor %vm219, %vm220
    %v222 = vsel %vm221, %v213, %v218
    %v223 = vrsqrt.pop %v192
    %v224 = vmul.f32 %v223, %v192
    %v225 = vmul.f32 %v224, %v223
    %v226 = vmul.f32 0.5, %v225
    %v227 = vsub.f32 1.5, %v226
    %v228 = vmul.f32 %v223, %v227
    %vm229 = vweird.f32 %v192
    %vm230 = vweird.f32 %v223
    %vm231 = vmor %vm229, %vm230
    %v232 = vsel %vm231, %v223, %v228
    %vm233 = vcmask 392192
    %v235 = vsel %vm233, %v158, 0
    %v238 = vsel %vm233, %v159, 0
    %v241 = vsel %vm233, %v160, 0
    %v244 = vsel %vm233, %v161, 0
    %246 = vmatpush.msra.mxu0 0.0
    %247 = vmatpush.msra.mxu0 0.0
    %248 = vmatpush.msra.mxu0 0.0
    %249 = vmatpush.msra.mxu0 0.0
    %250 = vmatpush.msra.mxu0 0.0
    %251 = vmatpush.msra.mxu0 0.0
    %252 = vmatpush.msra.mxu0 0.0
    %253 = vmatpush.msra.mxu0 0.0
    %254 = vmatpush.msra.mxu0 0.0
    %255 = vmatpush.msra.mxu0 0.0
    %256 = vmatpush.msra.mxu0 %v167
    %257 = vmatpush.msra.mxu0 %v166
    %258 = vmatpush.msra.mxu0 %v165
    %259 = vmatpush.msra.mxu0 %v164
    %260 = vmatpush.msra.mxu0 %v163
    %261 = vmatpush.msra.mxu0 %v162
    %262 = vmatmul.f32.gmra.mxu0 %v235
    %v263 = vpop.f32.mrf.mxu0
    %v264 = vadd.f32 0.0, %v263
    %265 = vmatmul.f32.gmra.mxu0 %v238
    %v266 = vpop.f32.mrf.mxu0
    %v267 = vadd.f32 0.0, %v266
    %268 = vmatmul.f32.gmra.mxu0 %v241
    %v269 = vpop.f32.mrf.mxu0
    %v270 = vadd.f32 0.0, %v269
    %271 = vmatmul.f32.gmra.mxu0 %v244
    %v272 = vpop.f32.mrf.mxu0
    %v273 = vadd.f32 0.0, %v272
    %274 = vdwg.mxu0
    %v275 = vmul.f32 %v202, %v264
    %v276 = vmul.f32 %v212, %v267
    %v277 = vmul.f32 %v222, %v270
    %v278 = vmul.f32 %v232, %v273
    %v280 = vsel %vm176, %v154, 0
    %v283 = vsel %vm176, %v155, 0
    %v286 = vsel %vm176, %v156, 0
    %v289 = vsel %vm176, %v157, 0
    %291 = vmatpush.msra.mxu0 0.0
    %292 = vmatpush.msra.mxu0 0.0
    %293 = vmatpush.msra.mxu0 0.0
    %294 = vmatpush.msra.mxu0 0.0
    %295 = vmatpush.msra.mxu0 0.0
    %296 = vmatpush.msra.mxu0 0.0
    %297 = vmatpush.msra.mxu0 0.0
    %298 = vmatpush.msra.mxu0 0.0
    %299 = vmatpush.msra.mxu0 0.0
    %300 = vmatpush.msra.mxu0 0.0
    %301 = vmatpush.msra.mxu0 0.0
    %302 = vmatpush.msra.mxu0 0.0
    %303 = vmatpush.msra.mxu0 %v278
    %304 = vmatpush.msra.mxu0 %v277
    %305 = vmatpush.msra.mxu0 %v276
    %306 = vmatpush.msra.mxu0 %v275
    %307 = vmatmul.f32.gmra.mxu0 %v280
    %v308 = vpop.f32.mrf.mxu0
    %v309 = vadd.f32 0.0, %v308
    %310 = vmatmul.f32.gmra.mxu0 %v283
    %v311 = vpop.f32.mrf.mxu0
    %v312 = vadd.f32 0.0, %v311
    %313 = vmatmul.f32.gmra.mxu0 %v286
    %v314 = vpop.f32.mrf.mxu0
    %v315 = vadd.f32 0.0, %v314
    %316 = vmatmul.f32.gmra.mxu0 %v289
    %v317 = vpop.f32.mrf.mxu0
    %v318 = vadd.f32 0.0, %v317
    %319 = vdwg.mxu0
    %v320 = vmul.f32 %v202, %v309
    %v321 = vmul.f32 %v212, %v312
    %v322 = vmul.f32 %v222, %v315
    %v323 = vmul.f32 %v232, %v318
    %v325 = vperm.slane %v168, 0
    %v327 = vadd.f32 %v320, %v325
    %v328 = vadd.f32 %v321, %v325
    %v329 = vadd.f32 %v322, %v325
    %v330 = vadd.f32 %v323, %v325
    %v331 = vmax.f32 %v327, 0.0
    %v332 = vmax.f32 %v328, 0.0
    %v333 = vmax.f32 %v329, 0.0
    %v334 = vmax.f32 %v330, 0.0
    %v336 = vsel %vm233, %v331, 0
    %v339 = vsel %vm233, %v332, 0
    %v342 = vsel %vm233, %v333, 0
    %v345 = vsel %vm233, %v334, 0
    %347 = vmatpush.msra.mxu0 0.0
    %348 = vmatpush.msra.mxu0 0.0
    %349 = vmatpush.msra.mxu0 0.0
    %350 = vmatpush.msra.mxu0 0.0
    %351 = vmatpush.msra.mxu0 0.0
    %352 = vmatpush.msra.mxu0 0.0
    %353 = vmatpush.msra.mxu0 0.0
    %354 = vmatpush.msra.mxu0 0.0
    %355 = vmatpush.msra.mxu0 0.0
    %356 = vmatpush.msra.mxu0 0.0
    %357 = vmatpush.msra.mxu0 %v174
    %358 = vmatpush.msra.mxu0 %v173
    %359 = vmatpush.msra.mxu0 %v172
    %360 = vmatpush.msra.mxu0 %v171
    %361 = vmatpush.msra.mxu0 %v170
    %362 = vmatpush.msra.mxu0 %v169
    %363 = vmatmul.f32.gmra.mxu0 %v336
    %v364 = vpop.f32.mrf.mxu0
    %v365 = vadd.f32 0.0, %v364
    %366 = vmatmul.f32.gmra.mxu0 %v339
    %v367 = vpop.f32.mrf.mxu0
    %v368 = vadd.f32 0.0, %v367
    %369 = vmatmul.f32.gmra.mxu0 %v342
    %v370 = vpop.f32.mrf.mxu0
    %v371 = vadd.f32 0.0, %v370
    %372 = vmatmul.f32.gmra.mxu0 %v345
    %v373 = vpop.f32.mrf.mxu0
    %v374 = vadd.f32 0.0, %v373
    %375 = vdwg.mxu0
    %v376 = vmul.f32 %v202, %v365
    %v377 = vmul.f32 %v212, %v368
    %v378 = vmul.f32 %v222, %v371
    %v379 = vmul.f32 %v232, %v374
    %380 = vmatpush.msra.mxu0 0.0
    %381 = vmatpush.msra.mxu0 0.0
    %382 = vmatpush.msra.mxu0 0.0
    %383 = vmatpush.msra.mxu0 0.0
    %384 = vmatpush.msra.mxu0 0.0
    %385 = vmatpush.msra.mxu0 0.0
    %386 = vmatpush.msra.mxu0 0.0
    %387 = vmatpush.msra.mxu0 0.0
    %388 = vmatpush.msra.mxu0 0.0
    %389 = vmatpush.msra.mxu0 0.0
    %390 = vmatpush.msra.mxu0 0.0
    %391 = vmatpush.msra.mxu0 0.0
    %392 = vmatpush.msra.mxu0 %v379
    %393 = vmatpush.msra.mxu0 %v378
    %394 = vmatpush.msra.mxu0 %v377
    %395 = vmatpush.msra.mxu0 %v376
    %396 = vmatmul.f32.gmra.mxu0 %v280
    %v397 = vpop.f32.mrf.mxu0
    %v398 = vadd.f32 0.0, %v397
    %399 = vmatmul.f32.gmra.mxu0 %v283
    %v400 = vpop.f32.mrf.mxu0
    %v401 = vadd.f32 0.0, %v400
    %402 = vmatmul.f32.gmra.mxu0 %v286
    %v403 = vpop.f32.mrf.mxu0
    %v404 = vadd.f32 0.0, %v403
    %405 = vmatmul.f32.gmra.mxu0 %v289
    %v406 = vpop.f32.mrf.mxu0
    %v407 = vadd.f32 0.0, %v406
    %408 = vdwg.mxu0
    %v409 = vmul.f32 %v202, %v398
    %v410 = vmul.f32 %v212, %v401
    %v411 = vmul.f32 %v222, %v404
    %v412 = vmul.f32 %v232, %v407
    %v414 = vperm.slane %v175, 0
    %v416 = vadd.f32 %v409, %v414
    %v417 = vadd.f32 %v410, %v414
    %v418 = vadd.f32 %v411, %v414
    %v419 = vadd.f32 %v412, %v414
    %v420 = vmul.f32 %v416, %v416
    %v421 = vmul.f32 %v417, %v417
    %v422 = vmul.f32 %v418, %v418
    %v423 = vmul.f32 %v419, %v419
    %vm424 = vcmask 64512
    %v425 = vsel %vm424, %v420, 0.0
    %426 = vadd.xlane.f32.xlu0 %v425
    %v427 = vpop.xlane.xlu0 %426
    %v428 = vsel %vm424, %v421, 0.0
    %429 = vadd.xlane.f32.xlu0 %v428
    %v430 = vpop.xlane.xlu0 %429
    %v431 = vsel %vm424, %v422, 0.0
    %432 = vadd.xlane.f32.xlu0 %v431
    %v433 = vpop.xlane.xlu0 %432
    %v434 = vsel %vm424, %v423, 0.0
    %435 = vadd.xlane.f32.xlu0 %v434
    %v436 = vpop.xlane.xlu0 %435
    %v438 = vsel %vm424, %v416, 0
    %v441 = vsel %vm424, %v417, 0
    %v444 = vsel %vm424, %v418, 0
    %v447 = vsel %vm424, %v419, 0
    %449 = vmatpush.xpose.msra.mxu0 0.0
    %450 = vmatpush.xpose.msra.mxu0 0.0
    %451 = vmatpush.xpose.msra.mxu0 0.0
    %452 = vmatpush.xpose.msra.mxu0 0.0
    %453 = vmatpush.xpose.msra.mxu0 0.0
    %454 = vmatpush.xpose.msra.mxu0 0.0
    %455 = vmatpush.xpose.msra.mxu0 0.0
    %456 = vmatpush.xpose.msra.mxu0 0.0
    %457 = vmatpush.xpose.msra.mxu0 0.0
    %458 = vmatpush.xpose.msra.mxu0 0.0
    %459 = vmatpush.xpose.msra.mxu0 0.0
    %460 = vmatpush.xpose.msra.mxu0 0.0
    %461 = vmatpush.xpose.msra.mxu0 %v447
    %462 = vmatpush.xpose.msra.mxu0 %v444
    %463 = vmatpush.xpose.msra.mxu0 %v441
    %464 = vmatpush.xpose.msra.mxu0 %v438
    %465 = vmatmul.f32.gmra.mxu0 %v438
    %v466 = vpop.f32.mrf.mxu0
    %v467 = vadd.f32 0.0, %v466
    %468 = vmatmul.f32.gmra.mxu0 %v441
    %v469 = vpop.f32.mrf.mxu0
    %v470 = vadd.f32 0.0, %v469
    %471 = vmatmul.f32.gmra.mxu0 %v444
    %v472 = vpop.f32.mrf.mxu0
    %v473 = vadd.f32 0.0, %v472
    %474 = vmatmul.f32.gmra.mxu0 %v447
    %v475 = vpop.f32.mrf.mxu0
    %v476 = vadd.f32 0.0, %v475
    %477 = vdwg.mxu0
    %478 = vxpose.xlu0.b32.start [1/16] %v427, 128
    %479 = vxpose.xlu0.b32.cont [2/16] %v430, 128
    %480 = vxpose.xlu0.b32.cont [3/16] %v433, 128
    %481 = vxpose.xlu0.b32.cont [4/16] %v436, 128
    %482 = vxpose.xlu0.b32.cont [5/16] 0.0, 128
    %483 = vxpose.xlu0.b32.cont [6/16] 0.0, 128
    %484 = vxpose.xlu0.b32.cont [7/16] 0.0, 128
    %485 = vxpose.xlu0.b32.cont [8/16] 0.0, 128
    %486 = vxpose.xlu0.b32.cont [9/16] 0.0, 128
    %487 = vxpose.xlu0.b32.cont [10/16] 0.0, 128
    %488 = vxpose.xlu0.b32.cont [11/16] 0.0, 128
    %489 = vxpose.xlu0.b32.cont [12/16] 0.0, 128
    %490 = vxpose.xlu0.b32.cont [13/16] 0.0, 128
    %491 = vxpose.xlu0.b32.cont [14/16] 0.0, 128
    %492 = vxpose.xlu0.b32.cont [15/16] 0.0, 128
    %493 = vxpose.xlu0.b32.end [16/16] 0.0, 128
    %v494 = vpop.trf.xlu0
    %v495 = vpop.trf.xlu0
    %v496 = vpop.trf.xlu0
    %v497 = vpop.trf.xlu0
    %v498 = vpop.trf.xlu0
    %v499 = vpop.trf.xlu0
    %v500 = vpop.trf.xlu0
    %v501 = vpop.trf.xlu0
    %v502 = vpop.trf.xlu0
    %v503 = vpop.trf.xlu0
    %v504 = vpop.trf.xlu0
    %v505 = vpop.trf.xlu0
    %v506 = vpop.trf.xlu0
    %v507 = vpop.trf.xlu0
    %v508 = vpop.trf.xlu0
    %v509 = vpop.trf.xlu0
    %v510 = vperm.slane %v494, 0
    %v511 = vadd.f32 %v427, %v510
    %v512 = vadd.f32 %v430, %v510
    %v513 = vadd.f32 %v433, %v510
    %v514 = vadd.f32 %v436, %v510
    %v515 = vmul.f32 %v467, 2.0
    %v516 = vmul.f32 %v470, 2.0
    %v517 = vmul.f32 %v473, 2.0
    %v518 = vmul.f32 %v476, 2.0
    %v519 = vsub.f32 %v511, %v515
    %v520 = vsub.f32 %v512, %v516
    %v521 = vsub.f32 %v513, %v517
    %v522 = vsub.f32 %v514, %v518
    %v523 = vmax.f32 %v519, 0.0
    %v524 = vmax.f32 %v520, 0.0
    %v525 = vmax.f32 %v521, 0.0
    %v526 = vmax.f32 %v522, 0.0
    %s527 = sld [smem:[#allocation2]]
    %s528 = smax.f32 %s527, -5.0
    %s529 = smin.f32 %s528, 5.0
    %v530 = vstv %s529
    %v531 = vmul.f32 %v530, 1.442695
    %v532 = vpow.pop %v531
    %s533 = vtos %v532
    %v534 = vld [vmem:[%s3] sm:$0xff]
    %v535 = vld [vmem:[%s3 + $0x8] sm:$0xff]
    %v536 = vld [vmem:[%s3 + $0x10] sm:$0xff]
    %v537 = vld [vmem:[%s3 + $0x18] sm:$0xff]
    %v538 = vadd.f32 %v534, 1e-08
    %v539 = vadd.f32 %v535, 1e-08
    %v540 = vadd.f32 %v536, 1e-08
    %v541 = vadd.f32 %v537, 1e-08
    %v542 = vlog2.pop %v538
    %v543 = vmul.f32 %v542, 0.6931472
    %v544 = vlog2.pop %v539
    %v545 = vmul.f32 %v544, 0.6931472
    %v546 = vlog2.pop %v540
    %v547 = vmul.f32 %v546, 0.6931472
    %v548 = vlog2.pop %v541
    %v549 = vmul.f32 %v548, 0.6931472
    %v550 = vsub.f32 0.0, %v543
    %v551 = vsub.f32 0.0, %v545
    %v552 = vsub.f32 0.0, %v547
    %v553 = vsub.f32 0.0, %v549
    %v554 = vlog2.pop %v550
    %v555 = vmul.f32 %v554, 0.6931472
    %v556 = vlog2.pop %v551
    %v557 = vmul.f32 %v556, 0.6931472
    %v558 = vlog2.pop %v552
    %v559 = vmul.f32 %v558, 0.6931472
    %v560 = vlog2.pop %v553
    %v561 = vmul.f32 %v560, 0.6931472
    %v562 = vstv %s533
    %v563 = vmul.f32 %v523, %v562
    %v564 = vmul.f32 %v524, %v562
    %v565 = vmul.f32 %v525, %v562
    %v566 = vmul.f32 %v526, %v562
    %v567 = vsub.f32 %v555, %v563
    %v568 = vsub.f32 %v557, %v564
    %v569 = vsub.f32 %v559, %v565
    %v570 = vsub.f32 %v561, %v566
    %v571 = vsel %vm176, %v567, -inf
    %572 = vmax.xlane.f32.xlu0 %v571
    %v573 = vpop.xlane.xlu0 %572
    %v574 = vsel %vm176, %v568, -inf
    %575 = vmax.xlane.f32.xlu0 %v574
    %v576 = vpop.xlane.xlu0 %575
    %v577 = vsel %vm176, %v569, -inf
    %578 = vmax.xlane.f32.xlu0 %v577
    %v579 = vpop.xlane.xlu0 %578
    %v580 = vsel %vm176, %v570, -inf
    %581 = vmax.xlane.f32.xlu0 %v580
    %v582 = vpop.xlane.xlu0 %581
    %vm583 = vcmp.eq.f32.partialorder %v567, %v573
    %vm584 = vcmp.eq.f32.partialorder %v568, %v576
    %vm585 = vcmp.eq.f32.partialorder %v569, %v579
    %vm586 = vcmp.eq.f32.partialorder %v570, %v582
    %v587 = vsel %vm583, %v64, 32.0
    %v588 = vsel %vm584, %v64, 32.0
    %v589 = vsel %vm585, %v64, 32.0
    %v590 = vsel %vm586, %v64, 32.0
    %v591 = vsel %vm176, %v587, inf
    %592 = vmin.xlane.f32.xlu0 %v591
    %v593 = vpop.xlane.xlu0 %592
    %v594 = vsel %vm176, %v588, inf
    %595 = vmin.xlane.f32.xlu0 %v594
    %v596 = vpop.xlane.xlu0 %595
    %v597 = vsel %vm176, %v589, inf
    %598 = vmin.xlane.f32.xlu0 %v597
    %v599 = vpop.xlane.xlu0 %598
    %v600 = vsel %vm176, %v590, inf
    %601 = vmin.xlane.f32.xlu0 %v600
    %v602 = vpop.xlane.xlu0 %601
    %v603 = vcvt.f32.s32.to.zero.pseudo %v593
    %v604 = vcvt.f32.s32.to.zero.pseudo %v596
    %v605 = vcvt.f32.s32.to.zero.pseudo %v599
    %v606 = vcvt.f32.s32.to.zero.pseudo %v602
    %vm607 = vcmask 7168
    %608 = vst.msk [vmem:[%s13] sm:$0xff] %vm607, %v573
    %609 = vst.msk [vmem:[%s13 + $0x8] sm:$0xff] %vm607, %v576
    %610 = vst.msk [vmem:[%s13 + $0x10] sm:$0xff] %vm607, %v579
    %611 = vst.msk [vmem:[%s13 + $0x18] sm:$0xff] %vm607, %v582
    %vm612 = vcmp.eq.s32.totalorder %v63, %v603
    %vm613 = vcmp.eq.s32.totalorder %v63, %v604
    %vm614 = vcmp.eq.s32.totalorder %v63, %v605
    %vm615 = vcmp.eq.s32.totalorder %v63, %v606
    %v616 = vsel %vm612, -1e+30, %v567
    %v617 = vsel %vm613, -1e+30, %v568
    %v618 = vsel %vm614, -1e+30, %v569
    %v619 = vsel %vm615, -1e+30, %v570
    %v620 = vsel %vm176, %v616, -inf
    %621 = vmax.xlane.f32.xlu0 %v620
    %v622 = vpop.xlane.xlu0 %621
    %v623 = vsel %vm176, %v617, -inf
    %624 = vmax.xlane.f32.xlu0 %v623
    %v625 = vpop.xlane.xlu0 %624
    %v626 = vsel %vm176, %v618, -inf
    %627 = vmax.xlane.f32.xlu0 %v626
    %v628 = vpop.xlane.xlu0 %627
    %v629 = vsel %vm176, %v619, -inf
    %630 = vmax.xlane.f32.xlu0 %v629
    %v631 = vpop.xlane.xlu0 %630
    %vm632 = vcmp.eq.f32.partialorder %v616, %v622
    %vm633 = vcmp.eq.f32.partialorder %v617, %v625
    %vm634 = vcmp.eq.f32.partialorder %v618, %v628
    %vm635 = vcmp.eq.f32.partialorder %v619, %v631
    %v636 = vsel %vm632, %v64, 32.0
    %v637 = vsel %vm633, %v64, 32.0
    %v638 = vsel %vm634, %v64, 32.0
    %v639 = vsel %vm635, %v64, 32.0
    %v640 = vsel %vm176, %v636, inf
    %641 = vmin.xlane.f32.xlu0 %v640
    %v642 = vpop.xlane.xlu0 %641
    %v643 = vsel %vm176, %v637, inf
    %644 = vmin.xlane.f32.xlu0 %v643
    %v645 = vpop.xlane.xlu0 %644
    %v646 = vsel %vm176, %v638, inf
    %647 = vmin.xlane.f32.xlu0 %v646
    %v648 = vpop.xlane.xlu0 %647
    %v649 = vsel %vm176, %v639, inf
    %650 = vmin.xlane.f32.xlu0 %v649
    %v651 = vpop.xlane.xlu0 %650
    %v652 = vcvt.f32.s32.to.zero.pseudo %v642
    %v653 = vcvt.f32.s32.to.zero.pseudo %v645
    %v654 = vcvt.f32.s32.to.zero.pseudo %v648
    %v655 = vcvt.f32.s32.to.zero.pseudo %v651
    %vm656 = vcmask 15368
    %657 = vst.msk [vmem:[%s13] sm:$0xff] %vm656, %v622
    %658 = vst.msk [vmem:[%s13 + $0x8] sm:$0xff] %vm656, %v625
    %659 = vst.msk [vmem:[%s13 + $0x10] sm:$0xff] %vm656, %v628
    %660 = vst.msk [vmem:[%s13 + $0x18] sm:$0xff] %vm656, %v631
    %vm661 = vcmp.eq.s32.totalorder %v63, %v652
    %vm662 = vcmp.eq.s32.totalorder %v63, %v653
    %vm663 = vcmp.eq.s32.totalorder %v63, %v654
    %vm664 = vcmp.eq.s32.totalorder %v63, %v655
    %v665 = vsel %vm661, -1e+30, %v616
    %v666 = vsel %vm662, -1e+30, %v617
    %v667 = vsel %vm663, -1e+30, %v618
    %v668 = vsel %vm664, -1e+30, %v619
    %v669 = vsel %vm176, %v665, -inf
    %670 = vmax.xlane.f32.xlu0 %v669
    %v671 = vpop.xlane.xlu0 %670
    %v672 = vsel %vm176, %v666, -inf
    %673 = vmax.xlane.f32.xlu0 %v672
    %v674 = vpop.xlane.xlu0 %673
    %v675 = vsel %vm176, %v667, -inf
    %676 = vmax.xlane.f32.xlu0 %v675
    %v677 = vpop.xlane.xlu0 %676
    %v678 = vsel %vm176, %v668, -inf
    %679 = vmax.xlane.f32.xlu0 %v678
    %v680 = vpop.xlane.xlu0 %679
    %vm681 = vcmp.eq.f32.partialorder %v665, %v671
    %vm682 = vcmp.eq.f32.partialorder %v666, %v674
    %vm683 = vcmp.eq.f32.partialorder %v667, %v677
    %vm684 = vcmp.eq.f32.partialorder %v668, %v680
    %v685 = vsel %vm681, %v64, 32.0
    %v686 = vsel %vm682, %v64, 32.0
    %v687 = vsel %vm683, %v64, 32.0
    %v688 = vsel %vm684, %v64, 32.0
    %v689 = vsel %vm176, %v685, inf
    %690 = vmin.xlane.f32.xlu0 %v689
    %v691 = vpop.xlane.xlu0 %690
    %v692 = vsel %vm176, %v686, inf
    %693 = vmin.xlane.f32.xlu0 %v692
    %v694 = vpop.xlane.xlu0 %693
    %v695 = vsel %vm176, %v687, inf
    %696 = vmin.xlane.f32.xlu0 %v695
    %v697 = vpop.xlane.xlu0 %696
    %v698 = vsel %vm176, %v688, inf
    %699 = vmin.xlane.f32.xlu0 %v698
    %v700 = vpop.xlane.xlu0 %699
    %v701 = vcvt.f32.s32.to.zero.pseudo %v691
    %v702 = vcvt.f32.s32.to.zero.pseudo %v694
    %v703 = vcvt.f32.s32.to.zero.pseudo %v697
    %v704 = vcvt.f32.s32.to.zero.pseudo %v700
    %vm705 = vcmask 23568
    %706 = vst.msk [vmem:[%s13] sm:$0xff] %vm705, %v671
    %707 = vst.msk [vmem:[%s13 + $0x8] sm:$0xff] %vm705, %v674
    %708 = vst.msk [vmem:[%s13 + $0x10] sm:$0xff] %vm705, %v677
    %709 = vst.msk [vmem:[%s13 + $0x18] sm:$0xff] %vm705, %v680
    %vm710 = vcmp.eq.s32.totalorder %v63, %v701
    %vm711 = vcmp.eq.s32.totalorder %v63, %v702
    %vm712 = vcmp.eq.s32.totalorder %v63, %v703
    %vm713 = vcmp.eq.s32.totalorder %v63, %v704
    %v714 = vsel %vm710, -1e+30, %v665
    %v715 = vsel %vm711, -1e+30, %v666
    %v716 = vsel %vm712, -1e+30, %v667
    %v717 = vsel %vm713, -1e+30, %v668
    %v718 = vsel %vm176, %v714, -inf
    %719 = vmax.xlane.f32.xlu0 %v718
    %v720 = vpop.xlane.xlu0 %719
    %v721 = vsel %vm176, %v715, -inf
    %722 = vmax.xlane.f32.xlu0 %v721
    %v723 = vpop.xlane.xlu0 %722
    %v724 = vsel %vm176, %v716, -inf
    %725 = vmax.xlane.f32.xlu0 %v724
    %v726 = vpop.xlane.xlu0 %725
    %v727 = vsel %vm176, %v717, -inf
    %728 = vmax.xlane.f32.xlu0 %v727
    %v729 = vpop.xlane.xlu0 %728
    %vm730 = vcmp.eq.f32.partialorder %v714, %v720
    %vm731 = vcmp.eq.f32.partialorder %v715, %v723
    %vm732 = vcmp.eq.f32.partialorder %v716, %v726
    %vm733 = vcmp.eq.f32.partialorder %v717, %v729
    %v734 = vsel %vm730, %v64, 32.0
    %v735 = vsel %vm731, %v64, 32.0
    %v736 = vsel %vm732, %v64, 32.0
    %v737 = vsel %vm733, %v64, 32.0
    %v738 = vsel %vm176, %v734, inf
    %739 = vmin.xlane.f32.xlu0 %v738
    %v740 = vpop.xlane.xlu0 %739
    %v741 = vsel %vm176, %v735, inf
    %742 = vmin.xlane.f32.xlu0 %v741
    %v743 = vpop.xlane.xlu0 %742
    %v744 = vsel %vm176, %v736, inf
    %745 = vmin.xlane.f32.xlu0 %v744
    %v746 = vpop.xlane.xlu0 %745
    %v747 = vsel %vm176, %v737, inf
    %748 = vmin.xlane.f32.xlu0 %v747
    %v749 = vpop.xlane.xlu0 %748
    %v750 = vcvt.f32.s32.to.zero.pseudo %v740
    %v751 = vcvt.f32.s32.to.zero.pseudo %v743
    %v752 = vcvt.f32.s32.to.zero.pseudo %v746
    %v753 = vcvt.f32.s32.to.zero.pseudo %v749
    %vm754 = vcmask 31768
    %755 = vst.msk [vmem:[%s13] sm:$0xff] %vm754, %v720
    %756 = vst.msk [vmem:[%s13 + $0x8] sm:$0xff] %vm754, %v723
    %757 = vst.msk [vmem:[%s13 + $0x10] sm:$0xff] %vm754, %v726
    %758 = vst.msk [vmem:[%s13 + $0x18] sm:$0xff] %vm754, %v729
    %v759 = vld [vmem:[%s8] sm:$0xff]
    %v760 = vld [vmem:[%s8 + $0x8] sm:$0xff]
    %v761 = vld [vmem:[%s8 + $0x10] sm:$0xff]
    %v762 = vld [vmem:[%s8 + $0x18] sm:$0xff]
    %v763 = vld [vmem:[%s8 + $0x20] sm:$0xff]
    %v764 = vld [vmem:[%s8 + $0x28] sm:$0xff]
    %v765 = vld [vmem:[%s9] sm:$0x1]
    %v766 = vld [vmem:[%s10] sm:$0xff]
    %v767 = vld [vmem:[%s10 + $0x8] sm:$0xff]
    %v768 = vld [vmem:[%s10 + $0x10] sm:$0xff]
    %v769 = vld [vmem:[%s10 + $0x18] sm:$0xff]
    %v770 = vld [vmem:[%s10 + $0x20] sm:$0xff]
    %v771 = vld [vmem:[%s10 + $0x28] sm:$0xff]
    %v772 = vld [vmem:[%s11] sm:$0x1]
    %vm773 = vmor %vm65, %vm612
    %vm774 = vmor %vm66, %vm613
    %vm775 = vmor %vm67, %vm614
    %vm776 = vmor %vm68, %vm615
    %vm777 = vmor %vm773, %vm661
    %vm778 = vmor %vm774, %vm662
    %vm779 = vmor %vm775, %vm663
    %vm780 = vmor %vm776, %vm664
    %vm781 = vmor %vm777, %vm710
    %vm782 = vmor %vm778, %vm711
    %vm783 = vmor %vm779, %vm712
    %vm784 = vmor %vm780, %vm713
    %vm785 = vcmp.eq.s32.totalorder %v63, %v750
    %vm786 = vcmp.eq.s32.totalorder %v63, %v751
    %vm787 = vcmp.eq.s32.totalorder %v63, %v752
    %vm788 = vcmp.eq.s32.totalorder %v63, %v753
    %vm789 = vmor %vm781, %vm785
    %vm790 = vmor %vm782, %vm786
    %vm791 = vmor %vm783, %vm787
    %vm792 = vmor %vm784, %vm788
    %v793 = vsel %vm789, 1, 0
    %v794 = vsel %vm790, 1, 0
    %v795 = vsel %vm791, 1, 0
    %v796 = vsel %vm792, 1, 0
    %v797 = vcvt.s32.f32 %v793
    %v798 = vcvt.s32.f32 %v794
    %v799 = vcvt.s32.f32 %v795
    %v800 = vcvt.s32.f32 %v796
    %v801 = vsel %vm176, %v797, 0.0
    %802 = vadd.xlane.f32.xlu0 %v801
    %v803 = vpop.xlane.xlu0 %802
    %v804 = vsel %vm176, %v798, 0.0
    %805 = vadd.xlane.f32.xlu0 %v804
    %v806 = vpop.xlane.xlu0 %805
    %v807 = vsel %vm176, %v799, 0.0
    %808 = vadd.xlane.f32.xlu0 %v807
    %v809 = vpop.xlane.xlu0 %808
    %v810 = vsel %vm176, %v800, 0.0
    %811 = vadd.xlane.f32.xlu0 %v810
    %v812 = vpop.xlane.xlu0 %811
    %v813 = vmax.f32 %v803, 1e-12
    %v814 = vmax.f32 %v806, 1e-12
    %v815 = vmax.f32 %v809, 1e-12
    %v816 = vmax.f32 %v812, 1e-12
    %v817 = vrsqrt.pop %v813
    %v818 = vmul.f32 %v817, %v813
    %v819 = vmul.f32 %v818, %v817
    %v820 = vmul.f32 0.5, %v819
    %v821 = vsub.f32 1.5, %v820
    %v822 = vmul.f32 %v817, %v821
    %vm823 = vweird.f32 %v813
    %vm824 = vweird.f32 %v817
    %vm825 = vmor %vm823, %vm824
    %v826 = vsel %vm825, %v817, %v822
    %v827 = vrsqrt.pop %v814
    %v828 = vmul.f32 %v827, %v814
    %v829 = vmul.f32 %v828, %v827
    %v830 = vmul.f32 0.5, %v829
    %v831 = vsub.f32 1.5, %v830
    %v832 = vmul.f32 %v827, %v831
    %vm833 = vweird.f32 %v814
    %vm834 = vweird.f32 %v827
    %vm835 = vmor %vm833, %vm834
    %v836 = vsel %vm835, %v827, %v832
    %v837 = vrsqrt.pop %v815
    %v838 = vmul.f32 %v837, %v815
    %v839 = vmul.f32 %v838, %v837
    %v840 = vmul.f32 0.5, %v839
    %v841 = vsub.f32 1.5, %v840
    %v842 = vmul.f32 %v837, %v841
    %vm843 = vweird.f32 %v815
    %vm844 = vweird.f32 %v837
    %vm845 = vmor %vm843, %vm844
    %v846 = vsel %vm845, %v837, %v842
    %v847 = vrsqrt.pop %v816
    %v848 = vmul.f32 %v847, %v816
    %v849 = vmul.f32 %v848, %v847
    %v850 = vmul.f32 0.5, %v849
    %v851 = vsub.f32 1.5, %v850
    %v852 = vmul.f32 %v847, %v851
    %vm853 = vweird.f32 %v816
    %vm854 = vweird.f32 %v847
    %vm855 = vmor %vm853, %vm854
    %v856 = vsel %vm855, %v847, %v852
    %857 = vmatpush.msra.mxu0 0.0
    %858 = vmatpush.msra.mxu0 0.0
    %859 = vmatpush.msra.mxu0 0.0
    %860 = vmatpush.msra.mxu0 0.0
    %861 = vmatpush.msra.mxu0 0.0
    %862 = vmatpush.msra.mxu0 0.0
    %863 = vmatpush.msra.mxu0 0.0
    %864 = vmatpush.msra.mxu0 0.0
    %865 = vmatpush.msra.mxu0 0.0
    %866 = vmatpush.msra.mxu0 0.0
    %867 = vmatpush.msra.mxu0 %v764
    %868 = vmatpush.msra.mxu0 %v763
    %869 = vmatpush.msra.mxu0 %v762
    %870 = vmatpush.msra.mxu0 %v761
    %871 = vmatpush.msra.mxu0 %v760
    %872 = vmatpush.msra.mxu0 %v759
    %873 = vmatmul.f32.gmra.mxu0 %v336
    %v874 = vpop.f32.mrf.mxu0
    %v875 = vadd.f32 0.0, %v874
    %876 = vmatmul.f32.gmra.mxu0 %v339
    %v877 = vpop.f32.mrf.mxu0
    %v878 = vadd.f32 0.0, %v877
    %879 = vmatmul.f32.gmra.mxu0 %v342
    %v880 = vpop.f32.mrf.mxu0
    %v881 = vadd.f32 0.0, %v880
    %882 = vmatmul.f32.gmra.mxu0 %v345
    %v883 = vpop.f32.mrf.mxu0
    %v884 = vadd.f32 0.0, %v883
    %885 = vdwg.mxu0
    %v886 = vmul.f32 %v826, %v875
    %v887 = vmul.f32 %v836, %v878
    %v888 = vmul.f32 %v846, %v881
    %v889 = vmul.f32 %v856, %v884
    %v891 = vsel %vm176, %v797, 0
    %v894 = vsel %vm176, %v798, 0
    %v897 = vsel %vm176, %v799, 0
    %v900 = vsel %vm176, %v800, 0
    %902 = vmatpush.msra.mxu0 0.0
    %903 = vmatpush.msra.mxu0 0.0
    %904 = vmatpush.msra.mxu0 0.0
    %905 = vmatpush.msra.mxu0 0.0
    %906 = vmatpush.msra.mxu0 0.0
    %907 = vmatpush.msra.mxu0 0.0
    %908 = vmatpush.msra.mxu0 0.0
    %909 = vmatpush.msra.mxu0 0.0
    %910 = vmatpush.msra.mxu0 0.0
    %911 = vmatpush.msra.mxu0 0.0
    %912 = vmatpush.msra.mxu0 0.0
    %913 = vmatpush.msra.mxu0 0.0
    %914 = vmatpush.msra.mxu0 %v889
    %915 = vmatpush.msra.mxu0 %v888
    %916 = vmatpush.msra.mxu0 %v887
    %917 = vmatpush.msra.mxu0 %v886
    %918 = vmatmul.f32.gmra.mxu0 %v891
    %v919 = vpop.f32.mrf.mxu0
    %v920 = vadd.f32 0.0, %v919
    %921 = vmatmul.f32.gmra.mxu0 %v894
    %v922 = vpop.f32.mrf.mxu0
    %v923 = vadd.f32 0.0, %v922
    %924 = vmatmul.f32.gmra.mxu0 %v897
    %v925 = vpop.f32.mrf.mxu0
    %v926 = vadd.f32 0.0, %v925
    %927 = vmatmul.f32.gmra.mxu0 %v900
    %v928 = vpop.f32.mrf.mxu0
    %v929 = vadd.f32 0.0, %v928
    %930 = vdwg.mxu0
    %v931 = vmul.f32 %v826, %v920
    %v932 = vmul.f32 %v836, %v923
    %v933 = vmul.f32 %v846, %v926
    %v934 = vmul.f32 %v856, %v929
    %v936 = vperm.slane %v765, 0
    %v938 = vadd.f32 %v931, %v936
    %v939 = vadd.f32 %v932, %v936
    %v940 = vadd.f32 %v933, %v936
    %v941 = vadd.f32 %v934, %v936
    %v942 = vmax.f32 %v938, 0.0
    %v943 = vmax.f32 %v939, 0.0
    %v944 = vmax.f32 %v940, 0.0
    %v945 = vmax.f32 %v941, 0.0
    %v947 = vsel %vm233, %v942, 0
    %v950 = vsel %vm233, %v943, 0
    %v953 = vsel %vm233, %v944, 0
    %v956 = vsel %vm233, %v945, 0
    %958 = vmatpush.msra.mxu0 0.0
    %959 = vmatpush.msra.mxu0 0.0
    %960 = vmatpush.msra.mxu0 0.0
    %961 = vmatpush.msra.mxu0 0.0
    %962 = vmatpush.msra.mxu0 0.0
    %963 = vmatpush.msra.mxu0 0.0
    %964 = vmatpush.msra.mxu0 0.0
    %965 = vmatpush.msra.mxu0 0.0
    %966 = vmatpush.msra.mxu0 0.0
    %967 = vmatpush.msra.mxu0 0.0
    %968 = vmatpush.msra.mxu0 %v771
    %969 = vmatpush.msra.mxu0 %v770
    %970 = vmatpush.msra.mxu0 %v769
    %971 = vmatpush.msra.mxu0 %v768
    %972 = vmatpush.msra.mxu0 %v767
    %973 = vmatpush.msra.mxu0 %v766
    %974 = vmatmul.f32.gmra.mxu0 %v947
    %v975 = vpop.f32.mrf.mxu0
    %v976 = vadd.f32 0.0, %v975
    %977 = vmatmul.f32.gmra.mxu0 %v950
    %v978 = vpop.f32.mrf.mxu0
    %v979 = vadd.f32 0.0, %v978
    %980 = vmatmul.f32.gmra.mxu0 %v953
    %v981 = vpop.f32.mrf.mxu0
    %v982 = vadd.f32 0.0, %v981
    %983 = vmatmul.f32.gmra.mxu0 %v956
    %v984 = vpop.f32.mrf.mxu0
    %v985 = vadd.f32 0.0, %v984
    %986 = vdwg.mxu0
    %v987 = vmul.f32 %v826, %v976
    %v988 = vmul.f32 %v836, %v979
    %v989 = vmul.f32 %v846, %v982
    %v990 = vmul.f32 %v856, %v985
    %991 = vmatpush.msra.mxu0 0.0
    %992 = vmatpush.msra.mxu0 0.0
    %993 = vmatpush.msra.mxu0 0.0
    %994 = vmatpush.msra.mxu0 0.0
    %995 = vmatpush.msra.mxu0 0.0
    %996 = vmatpush.msra.mxu0 0.0
    %997 = vmatpush.msra.mxu0 0.0
    %998 = vmatpush.msra.mxu0 0.0
    %999 = vmatpush.msra.mxu0 0.0
    %1000 = vmatpush.msra.mxu0 0.0
    %1001 = vmatpush.msra.mxu0 0.0
    %1002 = vmatpush.msra.mxu0 0.0
    %1003 = vmatpush.msra.mxu0 %v990
    %1004 = vmatpush.msra.mxu0 %v989
    %1005 = vmatpush.msra.mxu0 %v988
    %1006 = vmatpush.msra.mxu0 %v987
    %1007 = vmatmul.f32.gmra.mxu0 %v891
    %v1008 = vpop.f32.mrf.mxu0
    %v1009 = vadd.f32 0.0, %v1008
    %1010 = vmatmul.f32.gmra.mxu0 %v894
    %v1011 = vpop.f32.mrf.mxu0
    %v1012 = vadd.f32 0.0, %v1011
    %1013 = vmatmul.f32.gmra.mxu0 %v897
    %v1014 = vpop.f32.mrf.mxu0
    %v1015 = vadd.f32 0.0, %v1014
    %1016 = vmatmul.f32.gmra.mxu0 %v900
    %v1017 = vpop.f32.mrf.mxu0
    %v1018 = vadd.f32 0.0, %v1017
    %1019 = vdwg.mxu0
    %v1020 = vmul.f32 %v826, %v1009
    %v1021 = vmul.f32 %v836, %v1012
    %v1022 = vmul.f32 %v846, %v1015
    %v1023 = vmul.f32 %v856, %v1018
    %v1025 = vperm.slane %v772, 0
    %v1027 = vadd.f32 %v1020, %v1025
    %v1028 = vadd.f32 %v1021, %v1025
    %v1029 = vadd.f32 %v1022, %v1025
    %v1030 = vadd.f32 %v1023, %v1025
    %v1031 = vmul.f32 %v1027, %v1027
    %v1032 = vmul.f32 %v1028, %v1028
    %v1033 = vmul.f32 %v1029, %v1029
    %v1034 = vmul.f32 %v1030, %v1030
    %v1035 = vsel %vm424, %v1031, 0.0
    %1036 = vadd.xlane.f32.xlu0 %v1035
    %v1037 = vpop.xlane.xlu0 %1036
    %v1038 = vsel %vm424, %v1032, 0.0
    %1039 = vadd.xlane.f32.xlu0 %v1038
    %v1040 = vpop.xlane.xlu0 %1039
    %v1041 = vsel %vm424, %v1033, 0.0
    %1042 = vadd.xlane.f32.xlu0 %v1041
    %v1043 = vpop.xlane.xlu0 %1042
    %v1044 = vsel %vm424, %v1034, 0.0
    %1045 = vadd.xlane.f32.xlu0 %v1044
    %v1046 = vpop.xlane.xlu0 %1045
    %v1048 = vsel %vm424, %v1027, 0
    %v1051 = vsel %vm424, %v1028, 0
    %v1054 = vsel %vm424, %v1029, 0
    %v1057 = vsel %vm424, %v1030, 0
    %1059 = vmatpush.xpose.msra.mxu0 0.0
    %1060 = vmatpush.xpose.msra.mxu0 0.0
    %1061 = vmatpush.xpose.msra.mxu0 0.0
    %1062 = vmatpush.xpose.msra.mxu0 0.0
    %1063 = vmatpush.xpose.msra.mxu0 0.0
    %1064 = vmatpush.xpose.msra.mxu0 0.0
    %1065 = vmatpush.xpose.msra.mxu0 0.0
    %1066 = vmatpush.xpose.msra.mxu0 0.0
    %1067 = vmatpush.xpose.msra.mxu0 0.0
    %1068 = vmatpush.xpose.msra.mxu0 0.0
    %1069 = vmatpush.xpose.msra.mxu0 0.0
    %1070 = vmatpush.xpose.msra.mxu0 0.0
    %1071 = vmatpush.xpose.msra.mxu0 %v1057
    %1072 = vmatpush.xpose.msra.mxu0 %v1054
    %1073 = vmatpush.xpose.msra.mxu0 %v1051
    %1074 = vmatpush.xpose.msra.mxu0 %v1048
    %1075 = vmatmul.f32.gmra.mxu0 %v1048
    %v1076 = vpop.f32.mrf.mxu0
    %v1077 = vadd.f32 0.0, %v1076
    %1078 = vmatmul.f32.gmra.mxu0 %v1051
    %v1079 = vpop.f32.mrf.mxu0
    %v1080 = vadd.f32 0.0, %v1079
    %1081 = vmatmul.f32.gmra.mxu0 %v1054
    %v1082 = vpop.f32.mrf.mxu0
    %v1083 = vadd.f32 0.0, %v1082
    %1084 = vmatmul.f32.gmra.mxu0 %v1057
    %v1085 = vpop.f32.mrf.mxu0
    %v1086 = vadd.f32 0.0, %v1085
    %1087 = vdwg.mxu0
    %1088 = vxpose.xlu0.b32.start [1/16] %v1037, 128
    %1089 = vxpose.xlu0.b32.cont [2/16] %v1040, 128
    %1090 = vxpose.xlu0.b32.cont [3/16] %v1043, 128
    %1091 = vxpose.xlu0.b32.cont [4/16] %v1046, 128
    %1092 = vxpose.xlu0.b32.cont [5/16] 0.0, 128
    %1093 = vxpose.xlu0.b32.cont [6/16] 0.0, 128
    %1094 = vxpose.xlu0.b32.cont [7/16] 0.0, 128
    %1095 = vxpose.xlu0.b32.cont [8/16] 0.0, 128
    %1096 = vxpose.xlu0.b32.cont [9/16] 0.0, 128
    %1097 = vxpose.xlu0.b32.cont [10/16] 0.0, 128
    %1098 = vxpose.xlu0.b32.cont [11/16] 0.0, 128
    %1099 = vxpose.xlu0.b32.cont [12/16] 0.0, 128
    %1100 = vxpose.xlu0.b32.cont [13/16] 0.0, 128
    %1101 = vxpose.xlu0.b32.cont [14/16] 0.0, 128
    %1102 = vxpose.xlu0.b32.cont [15/16] 0.0, 128
    %1103 = vxpose.xlu0.b32.end [16/16] 0.0, 128
    %v1104 = vpop.trf.xlu0
    %v1105 = vpop.trf.xlu0
    %v1106 = vpop.trf.xlu0
    %v1107 = vpop.trf.xlu0
    %v1108 = vpop.trf.xlu0
    %v1109 = vpop.trf.xlu0
    %v1110 = vpop.trf.xlu0
    %v1111 = vpop.trf.xlu0
    %v1112 = vpop.trf.xlu0
    %v1113 = vpop.trf.xlu0
    %v1114 = vpop.trf.xlu0
    %v1115 = vpop.trf.xlu0
    %v1116 = vpop.trf.xlu0
    %v1117 = vpop.trf.xlu0
    %v1118 = vpop.trf.xlu0
    %v1119 = vpop.trf.xlu0
    %v1120 = vperm.slane %v1104, 0
    %v1121 = vadd.f32 %v1037, %v1120
    %v1122 = vadd.f32 %v1040, %v1120
    %v1123 = vadd.f32 %v1043, %v1120
    %v1124 = vadd.f32 %v1046, %v1120
    %v1125 = vmul.f32 %v1077, 2.0
    %v1126 = vmul.f32 %v1080, 2.0
    %v1127 = vmul.f32 %v1083, 2.0
    %v1128 = vmul.f32 %v1086, 2.0
    %v1129 = vsub.f32 %v1121, %v1125
    %v1130 = vsub.f32 %v1122, %v1126
    %v1131 = vsub.f32 %v1123, %v1127
    %v1132 = vsub.f32 %v1124, %v1128
    %v1133 = vmax.f32 %v1129, 0.0
    %v1134 = vmax.f32 %v1130, 0.0
    %v1135 = vmax.f32 %v1131, 0.0
    %v1136 = vmax.f32 %v1132, 0.0
    %s1137 = sld [smem:[#allocation2 + $0x1]]
    %s1138 = smax.f32 %s1137, -5.0
    %s1139 = smin.f32 %s1138, 5.0
    %v1140 = vstv %s1139
    %v1141 = vmul.f32 %v1140, 1.442695
    %v1142 = vpow.pop %v1141
    %s1143 = vtos %v1142
    %s1144 = scalar_lea.vmem %s3, 32
    %v1145 = vld [vmem:[%s1144] sm:$0xff]
    %v1146 = vld [vmem:[%s1144 + $0x8] sm:$0xff]
    %v1147 = vld [vmem:[%s1144 + $0x10] sm:$0xff]
    %v1148 = vld [vmem:[%s1144 + $0x18] sm:$0xff]
    %v1149 = vadd.f32 %v1145, 1e-08
    %v1150 = vadd.f32 %v1146, 1e-08
    %v1151 = vadd.f32 %v1147, 1e-08
    %v1152 = vadd.f32 %v1148, 1e-08
    %v1153 = vlog2.pop %v1149
    %v1154 = vmul.f32 %v1153, 0.6931472
    %v1155 = vlog2.pop %v1150
    %v1156 = vmul.f32 %v1155, 0.6931472
    %v1157 = vlog2.pop %v1151
    %v1158 = vmul.f32 %v1157, 0.6931472
    %v1159 = vlog2.pop %v1152
    %v1160 = vmul.f32 %v1159, 0.6931472
    %v1161 = vsub.f32 0.0, %v1154
    %v1162 = vsub.f32 0.0, %v1156
    %v1163 = vsub.f32 0.0, %v1158
    %v1164 = vsub.f32 0.0, %v1160
    %v1165 = vlog2.pop %v1161
    %v1166 = vmul.f32 %v1165, 0.6931472
    %v1167 = vlog2.pop %v1162
    %v1168 = vmul.f32 %v1167, 0.6931472
    %v1169 = vlog2.pop %v1163
    %v1170 = vmul.f32 %v1169, 0.6931472
    %v1171 = vlog2.pop %v1164
    %v1172 = vmul.f32 %v1171, 0.6931472
    %v1173 = vstv %s1143
    %v1174 = vmul.f32 %v1133, %v1173
    %v1175 = vmul.f32 %v1134, %v1173
    %v1176 = vmul.f32 %v1135, %v1173
    %v1177 = vmul.f32 %v1136, %v1173
    %v1178 = vsub.f32 %v1166, %v1174
    %v1179 = vsub.f32 %v1168, %v1175
    %v1180 = vsub.f32 %v1170, %v1176
    %v1181 = vsub.f32 %v1172, %v1177
    %v1182 = vsel %vm176, %v1178, -inf
    %1183 = vmax.xlane.f32.xlu0 %v1182
    %v1184 = vpop.xlane.xlu0 %1183
    %v1185 = vsel %vm176, %v1179, -inf
    %1186 = vmax.xlane.f32.xlu0 %v1185
    %v1187 = vpop.xlane.xlu0 %1186
    %v1188 = vsel %vm176, %v1180, -inf
    %1189 = vmax.xlane.f32.xlu0 %v1188
    %v1190 = vpop.xlane.xlu0 %1189
    %v1191 = vsel %vm176, %v1181, -inf
    %1192 = vmax.xlane.f32.xlu0 %v1191
    %v1193 = vpop.xlane.xlu0 %1192
    %vm1194 = vcmp.eq.f32.partialorder %v1178, %v1184
    %vm1195 = vcmp.eq.f32.partialorder %v1179, %v1187
    %vm1196 = vcmp.eq.f32.partialorder %v1180, %v1190
    %vm1197 = vcmp.eq.f32.partialorder %v1181, %v1193
    %v1198 = vsel %vm1194, %v64, 32.0
    %v1199 = vsel %vm1195, %v64, 32.0
    %v1200 = vsel %vm1196, %v64, 32.0
    %v1201 = vsel %vm1197, %v64, 32.0
    %v1202 = vsel %vm176, %v1198, inf
    %1203 = vmin.xlane.f32.xlu0 %v1202
    %v1204 = vpop.xlane.xlu0 %1203
    %v1205 = vsel %vm176, %v1199, inf
    %1206 = vmin.xlane.f32.xlu0 %v1205
    %v1207 = vpop.xlane.xlu0 %1206
    %v1208 = vsel %vm176, %v1200, inf
    %1209 = vmin.xlane.f32.xlu0 %v1208
    %v1210 = vpop.xlane.xlu0 %1209
    %v1211 = vsel %vm176, %v1201, inf
    %1212 = vmin.xlane.f32.xlu0 %v1211
    %v1213 = vpop.xlane.xlu0 %1212
    %v1214 = vcvt.f32.s32.to.zero.pseudo %v1204
    %v1215 = vcvt.f32.s32.to.zero.pseudo %v1207
    %v1216 = vcvt.f32.s32.to.zero.pseudo %v1210
    %v1217 = vcvt.f32.s32.to.zero.pseudo %v1213
    %vm1218 = vcmask 39968
    %1219 = vst.msk [vmem:[%s13] sm:$0xff] %vm1218, %v1184
    %1220 = vst.msk [vmem:[%s13 + $0x8] sm:$0xff] %vm1218, %v1187
    %1221 = vst.msk [vmem:[%s13 + $0x10] sm:$0xff] %vm1218, %v1190
    %1222 = vst.msk [vmem:[%s13 + $0x18] sm:$0xff] %vm1218, %v1193
    %1223 = vst.msk [vmem:[%s14] sm:$0xff] %vm607, %v1214
    %1224 = vst.msk [vmem:[%s14 + $0x8] sm:$0xff] %vm607, %v1215
    %1225 = vst.msk [vmem:[%s14 + $0x10] sm:$0xff] %vm607, %v1216
    %1226 = vst.msk [vmem:[%s14 + $0x18] sm:$0xff] %vm607, %v1217
    %vm1227 = vcmp.eq.s32.totalorder %v63, %v1214
    %vm1228 = vcmp.eq.s32.totalorder %v63, %v1215
    %vm1229 = vcmp.eq.s32.totalorder %v63, %v1216
    %vm1230 = vcmp.eq.s32.totalorder %v63, %v1217
    %v1231 = vsel %vm1227, -1e+30, %v1178
    %v1232 = vsel %vm1228, -1e+30, %v1179
    %v1233 = vsel %vm1229, -1e+30, %v1180
    %v1234 = vsel %vm1230, -1e+30, %v1181
    %v1235 = vsel %vm176, %v1231, -inf
    %1236 = vmax.xlane.f32.xlu0 %v1235
    %v1237 = vpop.xlane.xlu0 %1236
    %v1238 = vsel %vm176, %v1232, -inf
    %1239 = vmax.xlane.f32.xlu0 %v1238
    %v1240 = vpop.xlane.xlu0 %1239
    %v1241 = vsel %vm176, %v1233, -inf
    %1242 = vmax.xlane.f32.xlu0 %v1241
    %v1243 = vpop.xlane.xlu0 %1242
    %v1244 = vsel %vm176, %v1234, -inf
    %1245 = vmax.xlane.f32.xlu0 %v1244
    %v1246 = vpop.xlane.xlu0 %1245
    %vm1247 = vcmp.eq.f32.partialorder %v1231, %v1237
    %vm1248 = vcmp.eq.f32.partialorder %v1232, %v1240
    %vm1249 = vcmp.eq.f32.partialorder %v1233, %v1243
    %vm1250 = vcmp.eq.f32.partialorder %v1234, %v1246
    %v1251 = vsel %vm1247, %v64, 32.0
    %v1252 = vsel %vm1248, %v64, 32.0
    %v1253 = vsel %vm1249, %v64, 32.0
    %v1254 = vsel %vm1250, %v64, 32.0
    %v1255 = vsel %vm176, %v1251, inf
    %1256 = vmin.xlane.f32.xlu0 %v1255
    %v1257 = vpop.xlane.xlu0 %1256
    %v1258 = vsel %vm176, %v1252, inf
    %1259 = vmin.xlane.f32.xlu0 %v1258
    %v1260 = vpop.xlane.xlu0 %1259
    %v1261 = vsel %vm176, %v1253, inf
    %1262 = vmin.xlane.f32.xlu0 %v1261
    %v1263 = vpop.xlane.xlu0 %1262
    %v1264 = vsel %vm176, %v1254, inf
    %1265 = vmin.xlane.f32.xlu0 %v1264
    %v1266 = vpop.xlane.xlu0 %1265
    %v1267 = vcvt.f32.s32.to.zero.pseudo %v1257
    %v1268 = vcvt.f32.s32.to.zero.pseudo %v1260
    %v1269 = vcvt.f32.s32.to.zero.pseudo %v1263
    %v1270 = vcvt.f32.s32.to.zero.pseudo %v1266
    %vm1271 = vcmask 48168
    %1272 = vst.msk [vmem:[%s13] sm:$0xff] %vm1271, %v1237
    %1273 = vst.msk [vmem:[%s13 + $0x8] sm:$0xff] %vm1271, %v1240
    %1274 = vst.msk [vmem:[%s13 + $0x10] sm:$0xff] %vm1271, %v1243
    %1275 = vst.msk [vmem:[%s13 + $0x18] sm:$0xff] %vm1271, %v1246
    %1276 = vst.msk [vmem:[%s14] sm:$0xff] %vm656, %v1267
    %1277 = vst.msk [vmem:[%s14 + $0x8] sm:$0xff] %vm656, %v1268
    %1278 = vst.msk [vmem:[%s14 + $0x10] sm:$0xff] %vm656, %v1269
    %1279 = vst.msk [vmem:[%s14 + $0x18] sm:$0xff] %vm656, %v1270
    %vm1280 = vcmp.eq.s32.totalorder %v63, %v1267
    %vm1281 = vcmp.eq.s32.totalorder %v63, %v1268
    %vm1282 = vcmp.eq.s32.totalorder %v63, %v1269
    %vm1283 = vcmp.eq.s32.totalorder %v63, %v1270
    %v1284 = vsel %vm1280, -1e+30, %v1231
    %v1285 = vsel %vm1281, -1e+30, %v1232
    %v1286 = vsel %vm1282, -1e+30, %v1233
    %v1287 = vsel %vm1283, -1e+30, %v1234
    %v1288 = vsel %vm176, %v1284, -inf
    %1289 = vmax.xlane.f32.xlu0 %v1288
    %v1290 = vpop.xlane.xlu0 %1289
    %v1291 = vsel %vm176, %v1285, -inf
    %1292 = vmax.xlane.f32.xlu0 %v1291
    %v1293 = vpop.xlane.xlu0 %1292
    %v1294 = vsel %vm176, %v1286, -inf
    %1295 = vmax.xlane.f32.xlu0 %v1294
    %v1296 = vpop.xlane.xlu0 %1295
    %v1297 = vsel %vm176, %v1287, -inf
    %1298 = vmax.xlane.f32.xlu0 %v1297
    %v1299 = vpop.xlane.xlu0 %1298
    %vm1300 = vcmp.eq.f32.partialorder %v1284, %v1290
    %vm1301 = vcmp.eq.f32.partialorder %v1285, %v1293
    %vm1302 = vcmp.eq.f32.partialorder %v1286, %v1296
    %vm1303 = vcmp.eq.f32.partialorder %v1287, %v1299
    %v1304 = vsel %vm1300, %v64, 32.0
    %v1305 = vsel %vm1301, %v64, 32.0
    %v1306 = vsel %vm1302, %v64, 32.0
    %v1307 = vsel %vm1303, %v64, 32.0
    %v1308 = vsel %vm176, %v1304, inf
    %1309 = vmin.xlane.f32.xlu0 %v1308
    %v1310 = vpop.xlane.xlu0 %1309
    %v1311 = vsel %vm176, %v1305, inf
    %1312 = vmin.xlane.f32.xlu0 %v1311
    %v1313 = vpop.xlane.xlu0 %1312
    %v1314 = vsel %vm176, %v1306, inf
    %1315 = vmin.xlane.f32.xlu0 %v1314
    %v1316 = vpop.xlane.xlu0 %1315
    %v1317 = vsel %vm176, %v1307, inf
    %1318 = vmin.xlane.f32.xlu0 %v1317
    %v1319 = vpop.xlane.xlu0 %1318
    %v1320 = vcvt.f32.s32.to.zero.pseudo %v1310
    %v1321 = vcvt.f32.s32.to.zero.pseudo %v1313
    %v1322 = vcvt.f32.s32.to.zero.pseudo %v1316
    %v1323 = vcvt.f32.s32.to.zero.pseudo %v1319
    %vm1324 = vcmask 56368
    %1325 = vst.msk [vmem:[%s13] sm:$0xff] %vm1324, %v1290
    %1326 = vst.msk [vmem:[%s13 + $0x8] sm:$0xff] %vm1324, %v1293
    %1327 = vst.msk [vmem:[%s13 + $0x10] sm:$0xff] %vm1324, %v1296
    %1328 = vst.msk [vmem:[%s13 + $0x18] sm:$0xff] %vm1324, %v1299
    %1329 = vst.msk [vmem:[%s14] sm:$0xff] %vm705, %v1320
    %1330 = vst.msk [vmem:[%s14 + $0x8] sm:$0xff] %vm705, %v1321
    %1331 = vst.msk [vmem:[%s14 + $0x10] sm:$0xff] %vm705, %v1322
    %1332 = vst.msk [vmem:[%s14 + $0x18] sm:$0xff] %vm705, %v1323
    %vm1333 = vcmp.eq.s32.totalorder %v63, %v1320
    %vm1334 = vcmp.eq.s32.totalorder %v63, %v1321
    %vm1335 = vcmp.eq.s32.totalorder %v63, %v1322
    %vm1336 = vcmp.eq.s32.totalorder %v63, %v1323
    %v1337 = vsel %vm1333, -1e+30, %v1284
    %v1338 = vsel %vm1334, -1e+30, %v1285
    %v1339 = vsel %vm1335, -1e+30, %v1286
    %v1340 = vsel %vm1336, -1e+30, %v1287
    %v1341 = vsel %vm176, %v1337, -inf
    %1342 = vmax.xlane.f32.xlu0 %v1341
    %v1343 = vpop.xlane.xlu0 %1342
    %v1344 = vsel %vm176, %v1338, -inf
    %1345 = vmax.xlane.f32.xlu0 %v1344
    %v1346 = vpop.xlane.xlu0 %1345
    %v1347 = vsel %vm176, %v1339, -inf
    %1348 = vmax.xlane.f32.xlu0 %v1347
    %v1349 = vpop.xlane.xlu0 %1348
    %v1350 = vsel %vm176, %v1340, -inf
    %1351 = vmax.xlane.f32.xlu0 %v1350
    %v1352 = vpop.xlane.xlu0 %1351
    %vm1353 = vcmp.eq.f32.partialorder %v1337, %v1343
    %vm1354 = vcmp.eq.f32.partialorder %v1338, %v1346
    %vm1355 = vcmp.eq.f32.partialorder %v1339, %v1349
    %vm1356 = vcmp.eq.f32.partialorder %v1340, %v1352
    %v1357 = vsel %vm1353, %v64, 32.0
    %v1358 = vsel %vm1354, %v64, 32.0
    %v1359 = vsel %vm1355, %v64, 32.0
    %v1360 = vsel %vm1356, %v64, 32.0
    %v1361 = vsel %vm176, %v1357, inf
    %1362 = vmin.xlane.f32.xlu0 %v1361
    %v1363 = vpop.xlane.xlu0 %1362
    %v1364 = vsel %vm176, %v1358, inf
    %1365 = vmin.xlane.f32.xlu0 %v1364
    %v1366 = vpop.xlane.xlu0 %1365
    %v1367 = vsel %vm176, %v1359, inf
    %1368 = vmin.xlane.f32.xlu0 %v1367
    %v1369 = vpop.xlane.xlu0 %1368
    %v1370 = vsel %vm176, %v1360, inf
    %1371 = vmin.xlane.f32.xlu0 %v1370
    %v1372 = vpop.xlane.xlu0 %1371
    %v1373 = vcvt.f32.s32.to.zero.pseudo %v1363
    %v1374 = vcvt.f32.s32.to.zero.pseudo %v1366
    %v1375 = vcvt.f32.s32.to.zero.pseudo %v1369
    %v1376 = vcvt.f32.s32.to.zero.pseudo %v1372
    %vm1377 = vcmask 64568
    %1378 = vst.msk [vmem:[%s13] sm:$0xff] %vm1377, %v1343
    %1379 = vst.msk [vmem:[%s13 + $0x8] sm:$0xff] %vm1377, %v1346
    %1380 = vst.msk [vmem:[%s13 + $0x10] sm:$0xff] %vm1377, %v1349
    %1381 = vst.msk [vmem:[%s13 + $0x18] sm:$0xff] %vm1377, %v1352
    %1382 = vst.msk [vmem:[%s14] sm:$0xff] %vm754, %v1373
    %1383 = vst.msk [vmem:[%s14 + $0x8] sm:$0xff] %vm754, %v1374
    %1384 = vst.msk [vmem:[%s14 + $0x10] sm:$0xff] %vm754, %v1375
    %1385 = vst.msk [vmem:[%s14 + $0x18] sm:$0xff] %vm754, %v1376
    %1386 = vst.msk [vmem:[%s12] sm:$0xff] %vm233, %v942
    %1387 = vst.msk [vmem:[%s12 + $0x8] sm:$0xff] %vm233, %v943
    %1388 = vst.msk [vmem:[%s12 + $0x10] sm:$0xff] %vm233, %v944
    %1389 = vst.msk [vmem:[%s12 + $0x18] sm:$0xff] %vm233, %v945
    // Predicated region
    $region54: #{dgm_forward.1} parent=1 // pred_check
      _
    $region55: #{dgm_forward.1} parent=1 // pred_check_branch
      %1391 = sbr.rel (0) target = $region57
    $region56: #{dgm_forward.1} parent=1 // pred_region
      _
    $region57: #{dgm_forward.1} parent=1 // pred_fallthru
      _
    // Predicated region
    $region58: #{dgm_forward.1} parent=1 // pred_check
      _
    $region59: #{dgm_forward.1} parent=1 // pred_check_branch
      %1393 = sbr.rel (0) target = $region61
    $region60: #{dgm_forward.1} parent=1 // pred_region
      _
    $region61: #{dgm_forward.1} parent=1 // pred_fallthru
      _
    // Predicated region
    $region62: #{dgm_forward.1} parent=1 // pred_check
      _
    $region63: #{dgm_forward.1} parent=1 // pred_check_branch
      %1395 = sbr.rel (0) target = $region65
    $region64: #{dgm_forward.1} parent=1 // pred_region
      _
    $region65: #{dgm_forward.1} parent=1 // pred_fallthru
      _
    // Predicated region
    $region66: #{dgm_forward.1} parent=1 // pred_check
      _
    $region67: #{dgm_forward.1} parent=1 // pred_check_branch
      %1397 = sbr.rel (0) target = $region69
    $region68: #{dgm_forward.1} parent=1 // pred_region
      _
    $region69: #{dgm_forward.1} parent=1 // pred_fallthru
      _
    // Predicated region
    $region70: #{dgm_forward.1} parent=1 // pred_check
      _
    $region71: #{dgm_forward.1} parent=1 // pred_check_branch
      %1399 = sbr.rel (0) target = $region73
    $region72: #{dgm_forward.1} parent=1 // pred_region
      _
    $region73: #{dgm_forward.1} parent=1 // pred_fallthru
      _
    // Predicated region
    $region74: #{dgm_forward.1} parent=1 // pred_check
      _
    $region75: #{dgm_forward.1} parent=1 // pred_check_branch
      %1401 = sbr.rel (0) target = $region77
    $region76: #{dgm_forward.1} parent=1 // pred_region
      _
    $region77: #{dgm_forward.1} parent=1 // pred_fallthru
      _
    %1402 = vsyncpa [#allocation3], 1

</llo_original>
